<compile_context>
chip_gen: v6e
topology: v6e:2x2x1
jax: 0.10.0
libtpu: 0.0.40
codegen_flags: <defaults>
</compile_context>

<pallas_src>
import jax
import jax.numpy as jnp
from jax.experimental import pallas as pl
from jax.experimental.pallas import tpu as pltpu

# ---- RPN config constants (torchvision defaults for RPN) --------------------
FG_IOU_THRESH = 0.7
BG_IOU_THRESH = 0.3
BATCH_SIZE_PER_IMAGE = 256
POSITIVE_FRACTION = 0.5
SL1_BETA = 1.0 / 9.0
WX, WY, WW, WH = 1.0, 1.0, 1.0, 1.0  # RPN box-coder weights (all ones)

# Anchor-lane tile sizes (the (G, TA) IoU temporaries bound the assign tile;
# the loss kernel is purely elementwise so it can take bigger tiles).
# TODO(synk): on v6e/v5e (128 MiB VMEM) these can be raised further and
#             vmem_limit_bytes set accordingly; these defaults are v7x-safe.
ASSIGN_ANCHOR_TILE = 8192
LOSS_ANCHOR_TILE = 32768


def _anchor_tile(A, cap):
    """Largest lane tile that divides A, is a multiple of 128 (or == A), <= cap."""
    if A <= cap:
        return A
    if A % 128 != 0:
        # TODO(synk): pad the anchor axis to a multiple of 128 before tiling.
        raise ValueError("anchor count must be a multiple of 128 to tile")
    ta = cap - cap % 128
    while ta >= 128:
        if A % ta == 0:
            return ta
        ta -= 128
    return 128


# =============================================================================
# Shared IoU helper (identical expression in both assign passes)
# =============================================================================
def _box_iou(gt, anch):
    """gt: (G, 4) f32 ; anch: (4, TA) f32 -> IoU (G, TA)."""
    ax1 = anch[0:1, :]
    ay1 = anch[1:2, :]
    ax2 = anch[2:3, :]
    ay2 = anch[3:4, :]
    gx1 = gt[:, 0:1]
    gy1 = gt[:, 1:2]
    gx2 = gt[:, 2:3]
    gy2 = gt[:, 3:4]

    area_g = (gx2 - gx1) * (gy2 - gy1)                                   # (G, 1)
    area_a = (ax2 - ax1) * (ay2 - ay1)                                   # (1, TA)

    iw = jnp.maximum(jnp.minimum(gx2, ax2) - jnp.maximum(gx1, ax1), 0.0)  # (G, TA)
    ih = jnp.maximum(jnp.minimum(gy2, ay2) - jnp.maximum(gy1, ay1), 0.0)
    inter = iw * ih
    union = area_g + area_a - inter
    # Guard degenerate/padded boxes (union == 0) -> IoU 0 instead of NaN.
    return jnp.where(union > 0.0, inter / union, 0.0)


# =============================================================================
# Kernel 1: per-GT max IoU over all anchor tiles (for low-quality-match restore)
# =============================================================================
def gt_max_kernel(gt_ref, anch_ref, gtmax_ref, acc_ref):
    t = pl.program_id(1)

    @pl.when(t == 0)
    def _init():
        acc_ref[...] = jnp.full(acc_ref.shape, -1.0, acc_ref.dtype)

    iou = _box_iou(gt_ref[...].astype(jnp.float32),
                   anch_ref[...].astype(jnp.float32))                     # (G, TA)
    acc_ref[...] = jnp.maximum(acc_ref[...], jnp.max(iou, axis=1, keepdims=True))

    @pl.when(t == pl.num_programs(1) - 1)
    def _finalize():
        gtmax_ref[...] = acc_ref[...]


# =============================================================================
# Kernel 2: matcher + labels + one-hot gather (MXU dot) + fused box_coder.encode
# =============================================================================
def assign_encode_kernel(gt_ref, gt_t_ref, gtmax_ref, anch_ref, out_ref):
    gt = gt_ref[...].astype(jnp.float32)                                  # (G, 4)
    anch = anch_ref[...].astype(jnp.float32)                              # (4, TA)
    G = gt.shape[0]

    iou = _box_iou(gt, anch)                                              # (G, TA)

    # --- Matcher: argmax over the GT (sublane) axis ---
    matched_vals = jnp.max(iou, axis=0, keepdims=True)                    # (1, TA)
    gidx = jax.lax.broadcasted_iota(jnp.int32, iou.shape, 0)              # (G, TA)
    # first index attaining the max (matches torch.max tie behaviour)
    all_matches = jnp.min(jnp.where(iou >= matched_vals, gidx, G),
                          axis=0, keepdims=True)                          # (1, TA)

    below = matched_vals < BG_IOU_THRESH
    between = jnp.logical_and(matched_vals >= BG_IOU_THRESH,
                              matched_vals < FG_IOU_THRESH)
    matched_idxs = jnp.where(below, -1, jnp.where(between, -2, all_matches))

    # allow_low_quality_matches=True: restore anchors whose IoU equals the
    # global (all-tile) per-GT max computed by gt_max_kernel.
    highest_per_gt = gtmax_ref[...]                                       # (G, 1)
    restore = jnp.max(jnp.where(iou == highest_per_gt, 1, 0),
                      axis=0, keepdims=True) > 0                          # (1, TA)
    matched_idxs = jnp.where(restore, all_matches, matched_idxs)

    # labels: 1 fg, 0 bg (BELOW_LOW_THRESHOLD == -1), -1 discard (-2)
    labels = (matched_idxs >= 0).astype(jnp.float32)
    labels = jnp.where(matched_idxs == -2, -1.0, labels)

    # matched_gt_boxes = gt_boxes[matched_idxs.clamp(min=0)] as an MXU matmul:
    # (4, G) @ (G, TA) one-hot -> (4, TA); keeps the XLU free for the reductions.
    clamped = jnp.maximum(matched_idxs, 0)                                # (1, TA)
    onehot = (gidx == clamped).astype(jnp.float32)                        # (G, TA)
    m = jnp.dot(gt_t_ref[...].astype(jnp.float32), onehot,
                preferred_element_type=jnp.float32)                       # (4, TA)

    # --- fused box_coder.encode (weights = (1,1,1,1)) ---
    ax1 = anch[0:1, :]; ay1 = anch[1:2, :]; ax2 = anch[2:3, :]; ay2 = anch[3:4, :]
    mx1 = m[0:1, :]; my1 = m[1:2, :]; mx2 = m[2:3, :]; my2 = m[3:4, :]

    ex_w = ax2 - ax1
    ex_h = ay2 - ay1
    ex_cx = ax1 + 0.5 * ex_w
    ex_cy = ay1 + 0.5 * ex_h
    gt_w = mx2 - mx1
    gt_h = my2 - my1
    gt_cx = mx1 + 0.5 * gt_w
    gt_cy = my1 + 0.5 * gt_h

    out_ref[0:1, :] = labels
    out_ref[1:2, :] = WX * (gt_cx - ex_cx) / ex_w
    out_ref[2:3, :] = WY * (gt_cy - ex_cy) / ex_h
    out_ref[3:4, :] = WW * jnp.log(gt_w / ex_w)
    out_ref[4:5, :] = WH * jnp.log(gt_h / ex_h)


def assign_and_encode(gt_boxes, anchors_t):
    """gt_boxes: [B, G, 4]; anchors_t: [B, 4, A] ->
       packed targets [B, 5, A] (row 0 labels, rows 1..4 regression targets)."""
    B, G, _ = gt_boxes.shape
    A = anchors_t.shape[-1]
    TA = _anchor_tile(A, ASSIGN_ANCHOR_TILE)
    nT = A // TA
    gt_t = jnp.transpose(gt_boxes, (0, 2, 1))                             # [B, 4, G]

    gtmax = pl.pallas_call(
        gt_max_kernel,
        out_shape=jax.ShapeDtypeStruct((B, G, 1), jnp.float32),
        grid=(B, nT),
        in_specs=[pl.BlockSpec((None, G, 4), lambda b, t: (b, 0, 0)),
                  pl.BlockSpec((None, 4, TA), lambda b, t: (b, 0, t))],
        out_specs=pl.BlockSpec((None, G, 1), lambda b, t: (b, 0, 0)),
        scratch_shapes=[pltpu.VMEM((G, 1), jnp.float32)],
        compiler_params=pltpu.CompilerParams(
            dimension_semantics=("parallel", "arbitrary")),
    )(gt_boxes, anchors_t)

    tgt_pack = pl.pallas_call(
        assign_encode_kernel,
        out_shape=jax.ShapeDtypeStruct((B, 5, A), jnp.float32),
        grid=(B, nT),
        in_specs=[pl.BlockSpec((None, G, 4), lambda b, t: (b, 0, 0)),
                  pl.BlockSpec((None, 4, G), lambda b, t: (b, 0, 0)),
                  pl.BlockSpec((None, G, 1), lambda b, t: (b, 0, 0)),
                  pl.BlockSpec((None, 4, TA), lambda b, t: (b, 0, t))],
        out_specs=pl.BlockSpec((None, 5, TA), lambda b, t: (b, 0, t)),
        compiler_params=pltpu.CompilerParams(
            dimension_semantics=("parallel", "parallel")),
    )(gt_boxes, gt_t, gtmax, anchors_t)
    return tgt_pack


# =============================================================================
# Kernel 3: masked smooth-L1 + BCE-with-logits -> per-(image, tile) partials
# =============================================================================
def loss_kernel(sc_ref, dl_ref, tg_ref, out_ref):
    sc = sc_ref[...].astype(jnp.float32)      # (3, TA): [objectness, pos, sampled]
    dl = dl_ref[...].astype(jnp.float32)      # (4, TA): predicted deltas
    tg = tg_ref[...]                          # (5, TA): [labels, dx, dy, dw, dh]

    obj = sc[0:1, :]
    pos = sc[1:2, :]
    smp = sc[2:3, :]
    y = tg[0:1, :]

    # smooth L1 (beta = 1/9) per delta component, where-masked (NaN/inf safe for
    # unmatched / degenerate targets), accumulated in lane space.
    sl1_lanes = jnp.zeros_like(pos)
    for c in range(4):
        d = dl[c:c + 1, :] - tg[c + 1:c + 2, :]
        ad = jnp.abs(d)
        sl1 = jnp.where(ad < SL1_BETA, 0.5 * d * d / SL1_BETA, ad - 0.5 * SL1_BETA)
        sl1_lanes = sl1_lanes + jnp.where(pos > 0.0, sl1, 0.0)
    box_sum = jnp.sum(sl1_lanes, axis=1, keepdims=True)                   # (1, 1)

    # BCE with logits over sampled (pos + neg) anchors.
    bce = jnp.maximum(obj, 0.0) - obj * y + jnp.log(1.0 + jnp.exp(-jnp.abs(obj)))
    bce = jnp.where(smp > 0.0, bce, 0.0)
    bce_sum = jnp.sum(bce, axis=1, keepdims=True)                         # (1, 1)
    cnt = jnp.sum(smp, axis=1, keepdims=True)                             # (1, 1)

    # Lane-dense partials: lane 0 = box, lane 1 = bce, lane 2 = count.
    lane = jax.lax.broadcasted_iota(jnp.int32, (1, 128), 1)
    out_ref[...] = jnp.where(lane == 0, box_sum,
                             jnp.where(lane == 1, bce_sum,
                                       jnp.where(lane == 2, cnt, 0.0)))


def rpn_losses(scores_pack, deltas_t, tgt_pack):
    """scores_pack [B,3,A], deltas_t [B,4,A], tgt_pack [B,5,A] -> (obj_loss, box_loss)."""
    B = scores_pack.shape[0]
    A = scores_pack.shape[-1]
    TA = _anchor_tile(A, LOSS_ANCHOR_TILE)
    nT = A // TA

    partials = pl.pallas_call(
        loss_kernel,
        out_shape=jax.ShapeDtypeStruct((B * nT, 1, 128), jnp.float32),
        grid=(B, nT),
        in_specs=[pl.BlockSpec((None, 3, TA), lambda b, t: (b, 0, t)),
                  pl.BlockSpec((None, 4, TA), lambda b, t: (b, 0, t)),
                  pl.BlockSpec((None, 5, TA), lambda b, t: (b, 0, t))],
        out_specs=pl.BlockSpec((None, 1, 128), lambda b, t: (b * nT + t, 0, 0)),
        compiler_params=pltpu.CompilerParams(
            dimension_semantics=("parallel", "parallel")),
    )(scores_pack, deltas_t, tgt_pack)

    p = partials[:, 0, :]
    total = jnp.sum(p[:, 2])
    box_loss = jnp.sum(p[:, 0]) / total
    obj_loss = jnp.sum(p[:, 1]) / total
    return obj_loss, box_loss


# =============================================================================
# JAX glue (flatten / sampler / packing)
# =============================================================================
def flatten_head_outputs(objectness_raw, deltas_raw):
    """Single feature level, NCHW.  objectness_raw: [B, Apl, H, W];
    deltas_raw: [B, Apl*4, H, W] -> (obj [B, A], deltas_t [B, 4, A]) with
    A = H*W*Apl ordered (h, w, anchor) like torchvision's permute_and_flatten.
    deltas_t is built directly in (B, 4, A) layout (no (B, A, 4) intermediate)."""
    B, Apl, H, W = objectness_raw.shape
    A = H * W * Apl
    obj = objectness_raw.reshape(B, Apl, H, W).transpose(0, 2, 3, 1).reshape(B, A)
    dl = deltas_raw.reshape(B, Apl, 4, H, W).transpose(0, 2, 3, 4, 1).reshape(B, 4, A)
    return obj, dl


def sample_fg_bg(labels):
    """BalancedPositiveNegativeSampler(256, 0.5) as boolean masks [B, A]."""
    # TODO(synk): torchvision uses torch.randperm for sampling; here we pick the
    #             first K positives/negatives deterministically (a valid sample).
    pos = labels >= 1.0
    neg = labels == 0.0
    num_pos_target = int(BATCH_SIZE_PER_IMAGE * POSITIVE_FRACTION)
    num_pos = jnp.minimum(jnp.sum(pos, axis=1), num_pos_target)
    num_neg = jnp.minimum(jnp.sum(neg, axis=1), BATCH_SIZE_PER_IMAGE - num_pos)
    pos_cum = jnp.cumsum(pos.astype(jnp.int32), axis=1)
    neg_cum = jnp.cumsum(neg.astype(jnp.int32), axis=1)
    pos_mask = jnp.logical_and(pos, pos_cum <= num_pos[:, None])
    neg_mask = jnp.logical_and(neg, neg_cum <= num_neg[:, None])
    return pos_mask.astype(jnp.float32), neg_mask.astype(jnp.float32)


def rpn_loss_forward(objectness_raw, deltas_raw, anchors, gt_boxes):
    """anchors: [B, A, 4]; gt_boxes: [B, G, 4] (targets[i]['boxes']).
    objectness/deltas may be bf16; kernels upcast to f32 internally."""
    # TODO(synk): images with zero GT boxes (reference's numel()==0 branch) are
    #             not handled; G >= 1 is assumed (pad with dummy boxes upstream).
    obj_flat, deltas_t = flatten_head_outputs(objectness_raw, deltas_raw)
    anchors_t = jnp.transpose(anchors.astype(jnp.float32), (0, 2, 1))     # [B, 4, A]
    gt_boxes = gt_boxes.astype(jnp.float32)

    tgt_pack = assign_and_encode(gt_boxes, anchors_t)                     # [B, 5, A]
    labels = tgt_pack[:, 0, :]                                            # [B, A]
    pos_mask, neg_mask = sample_fg_bg(labels)
    smp_mask = pos_mask + neg_mask
    scores_pack = jnp.stack(
        [obj_flat.astype(jnp.float32), pos_mask, smp_mask], axis=1)       # [B, 3, A]

    obj_loss, box_loss = rpn_losses(scores_pack, deltas_t, tgt_pack)
    return {"loss_objectness": obj_loss, "loss_rpn_box_reg": box_loss}


# =============================================================================
# Main
# =============================================================================
def _make_boxes(key, n, img_size=64.0):
    k1, k2, k3, k4 = jax.random.split(key, 4)
    x1 = jax.random.uniform(k1, (n,), minval=0.0, maxval=img_size - 16.0)
    y1 = jax.random.uniform(k2, (n,), minval=0.0, maxval=img_size - 16.0)
    w = jax.random.uniform(k3, (n,), minval=4.0, maxval=16.0)
    h = jax.random.uniform(k4, (n,), minval=4.0, maxval=16.0)
    return jnp.stack([x1, y1, x1 + w, y1 + h], axis=-1)


if __name__ == "__main__":
    B, Apl, H, W, G = 2, 4, 8, 8, 8
    A = H * W * Apl  # 256 anchors per image

    key = jax.random.PRNGKey(0)
    k_obj, k_del, k_anc, k_gt = jax.random.split(key, 4)

    # Simulated RPN-head outputs (NCHW, single feature level)
    objectness_raw = jax.random.normal(k_obj, (B, Apl, H, W), jnp.float32)
    deltas_raw = 0.1 * jax.random.normal(k_del, (B, Apl * 4, H, W), jnp.float32)

    # Synthetic anchors and ground-truth boxes (per image)
    anchors = jnp.stack([_make_boxes(k, A) for k in jax.random.split(k_anc, B)])  # [B, A, 4]
    gt_boxes = jnp.stack([_make_boxes(k, G) for k in jax.random.split(k_gt, B)])  # [B, G, 4]

    losses = jax.jit(rpn_loss_forward)(objectness_raw, deltas_raw, anchors, gt_boxes)
    jax.block_until_ready(losses)
    assert jnp.isfinite(losses["loss_objectness"]) and jnp.isfinite(losses["loss_rpn_box_reg"])
    print("KERNEL_OK")
</pallas_src>

<mosaic_0001>
module attributes {stable_mosaic.version = 11 : i64} {
  func.func @gt_max_kernel(%arg0: i32, %arg1: i32, %arg2: memref<1x8x4xf32, #tpu.memory_space<vmem>>, %arg3: memref<1x4x256xf32, #tpu.memory_space<vmem>>, %arg4: memref<1x8x1xf32, #tpu.memory_space<vmem>>, %arg5: memref<8x1xf32, #tpu.memory_space<vmem>>) attributes {dimension_semantics = [#tpu.dimension_semantics<parallel>, #tpu.dimension_semantics<arbitrary>], iteration_bounds = array<i64: 2, 1>, scalar_prefetch = 0 : i64, scratch_operands = 1 : i64, tpu.core_type = #tpu.core_type<tc>, window_params = [{transform_indices = @transform_0, window_bounds = array<i64: 1, 8, 4>}, {transform_indices = @transform_1, window_bounds = array<i64: 1, 4, 256>}, {transform_indices = @transform_2, window_bounds = array<i64: 1, 8, 1>}]} {
    %c0_i32 = arith.constant 0 : i32
    %0 = arith.cmpi eq, %arg1, %c0_i32 : i32
    %1 = arith.extui %0 : i1 to i32
    %c0_i32_0 = arith.constant 0 : i32
    %2 = arith.cmpi ne, %1, %c0_i32_0 : i32
    scf.if %2 {
      %cst_16 = arith.constant -1.000000e+00 : f32
      %57 = vector.broadcast %cst_16 : f32 to vector<8x1xf32>
      %c0_17 = arith.constant 0 : index
      %c0_18 = arith.constant 0 : index
      %58 = vector.load %arg5[%c0_17, %c0_18] : memref<8x1xf32, #tpu.memory_space<vmem>>, vector<8x1xf32>
      tpu.vector_store %arg5[%c0_17, %c0_18], %57 {strides = array<i32>} : memref<8x1xf32, #tpu.memory_space<vmem>>, vector<8x1xf32>,
    } else {
    }
    %c0 = arith.constant 0 : index
    %c0_1 = arith.constant 0 : index
    %c0_2 = arith.constant 0 : index
    %3 = vector.load %arg2[%c0, %c0_1, %c0_2] : memref<1x8x4xf32, #tpu.memory_space<vmem>>, vector<1x8x4xf32>
    %4 = vector.shape_cast %3 : vector<1x8x4xf32> to vector<8x4xf32>
    %c0_3 = arith.constant 0 : index
    %c0_4 = arith.constant 0 : index
    %c0_5 = arith.constant 0 : index
    %5 = vector.load %arg3[%c0_3, %c0_4, %c0_5] : memref<1x4x256xf32, #tpu.memory_space<vmem>>, vector<1x4x256xf32>
    %6 = vector.shape_cast %5 : vector<1x4x256xf32> to vector<4x256xf32>
    %7 = vector.extract_strided_slice %6 {offsets = [0, 0], sizes = [1, 256], strides = [1, 1]} : vector<4x256xf32> to vector<1x256xf32>
    %8 = vector.extract_strided_slice %6 {offsets = [1, 0], sizes = [1, 256], strides = [1, 1]} : vector<4x256xf32> to vector<1x256xf32>
    %9 = vector.extract_strided_slice %6 {offsets = [2, 0], sizes = [1, 256], strides = [1, 1]} : vector<4x256xf32> to vector<1x256xf32>
    %10 = vector.extract_strided_slice %6 {offsets = [3, 0], sizes = [1, 256], strides = [1, 1]} : vector<4x256xf32> to vector<1x256xf32>
    %11 = vector.extract_strided_slice %4 {offsets = [0, 0], sizes = [8, 1], strides = [1, 1]} : vector<8x4xf32> to vector<8x1xf32>
    %12 = vector.extract_strided_slice %4 {offsets = [0, 1], sizes = [8, 1], strides = [1, 1]} : vector<8x4xf32> to vector<8x1xf32>
    %13 = vector.extract_strided_slice %4 {offsets = [0, 2], sizes = [8, 1], strides = [1, 1]} : vector<8x4xf32> to vector<8x1xf32>
    %14 = vector.extract_strided_slice %4 {offsets = [0, 3], sizes = [8, 1], strides = [1, 1]} : vector<8x4xf32> to vector<8x1xf32>
    %15 = arith.subf %13, %11 : vector<8x1xf32>
    %16 = arith.subf %14, %12 : vector<8x1xf32>
    %17 = arith.mulf %15, %16 : vector<8x1xf32>
    %18 = arith.subf %9, %7 : vector<1x256xf32>
    %19 = arith.subf %10, %8 : vector<1x256xf32>
    %20 = arith.mulf %18, %19 : vector<1x256xf32>
    %21 = vector.broadcast %13 : vector<8x1xf32> to vector<8x256xf32>
    %22 = vector.broadcast %9 : vector<1x256xf32> to vector<8x256xf32>
    %23 = arith.minimumf %21, %22 : vector<8x256xf32>
    %24 = vector.broadcast %11 : vector<8x1xf32> to vector<8x256xf32>
    %25 = vector.broadcast %7 : vector<1x256xf32> to vector<8x256xf32>
    %26 = arith.maximumf %24, %25 : vector<8x256xf32>
    %27 = arith.subf %23, %26 : vector<8x256xf32>
    %cst = arith.constant 0.000000e+00 : f32
    %28 = vector.broadcast %cst : f32 to vector<8x256xf32>
    %29 = arith.maximumf %27, %28 : vector<8x256xf32>
    %30 = vector.broadcast %14 : vector<8x1xf32> to vector<8x256xf32>
    %31 = vector.broadcast %10 : vector<1x256xf32> to vector<8x256xf32>
    %32 = arith.minimumf %30, %31 : vector<8x256xf32>
    %33 = vector.broadcast %12 : vector<8x1xf32> to vector<8x256xf32>
    %34 = vector.broadcast %8 : vector<1x256xf32> to vector<8x256xf32>
    %35 = arith.maximumf %33, %34 : vector<8x256xf32>
    %36 = arith.subf %32, %35 : vector<8x256xf32>
    %cst_6 = arith.constant 0.000000e+00 : f32
    %37 = vector.broadcast %cst_6 : f32 to vector<8x256xf32>
    %38 = arith.maximumf %36, %37 : vector<8x256xf32>
    %39 = arith.mulf %29, %38 : vector<8x256xf32>
    %40 = vector.broadcast %17 : vector<8x1xf32> to vector<8x256xf32>
    %41 = vector.broadcast %20 : vector<1x256xf32> to vector<8x256xf32>
    %42 = arith.addf %40, %41 : vector<8x256xf32>
    %43 = arith.subf %42, %39 : vector<8x256xf32>
    %cst_7 = arith.constant 0.000000e+00 : f32
    %44 = vector.broadcast %cst_7 : f32 to vector<8x256xf32>
    %45 = arith.cmpf ogt, %43, %44 : vector<8x256xf32>
    %46 = arith.divf %39, %43 : vector<8x256xf32>
    %cst_8 = arith.constant 0.000000e+00 : f32
    %47 = vector.broadcast %cst_8 : f32 to vector<8x256xf32>
    %48 = arith.select %45, %46, %47 : vector<8x256xi1>, vector<8x256xf32>
    %c0_9 = arith.constant 0 : index
    %c0_10 = arith.constant 0 : index
    %49 = vector.load %arg5[%c0_9, %c0_10] : memref<8x1xf32, #tpu.memory_space<vmem>>, vector<8x1xf32>
    %cst_11 = arith.constant dense<0xFF800000> : vector<8xf32>
    %50 = vector.multi_reduction <maximumf>, %48, %cst_11 [1] : vector<8x256xf32> to vector<8xf32>
    %51 = vector.shape_cast %50 : vector<8xf32> to vector<8x1xf32>
    %52 = arith.maximumf %49, %51 : vector<8x1xf32>
    %c0_12 = arith.constant 0 : index
    %c0_13 = arith.constant 0 : index
    %53 = vector.load %arg5[%c0_12, %c0_13] : memref<8x1xf32, #tpu.memory_space<vmem>>, vector<8x1xf32>
    tpu.vector_store %arg5[%c0_12, %c0_13], %52 {strides = array<i32>} : memref<8x1xf32, #tpu.memory_space<vmem>>, vector<8x1xf32>,
    %c0_i32_14 = arith.constant 0 : i32
    %54 = arith.cmpi eq, %arg1, %c0_i32_14 : i32
    %55 = arith.extui %54 : i1 to i32
    %c0_i32_15 = arith.constant 0 : i32
    %56 = arith.cmpi ne, %55, %c0_i32_15 : i32
    scf.if %56 {
      %c0_16 = arith.constant 0 : index
      %c0_17 = arith.constant 0 : index
      %57 = vector.load %arg5[%c0_16, %c0_17] : memref<8x1xf32, #tpu.memory_space<vmem>>, vector<8x1xf32>
      %c0_18 = arith.constant 0 : index
      %c0_19 = arith.constant 0 : index
      %c0_20 = arith.constant 0 : index
      %58 = vector.load %arg4[%c0_18, %c0_19, %c0_20] : memref<1x8x1xf32, #tpu.memory_space<vmem>>, vector<1x8x1xf32>
      %59 = vector.shape_cast %58 : vector<1x8x1xf32> to vector<8x1xf32>
      %60 = vector.shape_cast %57 : vector<8x1xf32> to vector<1x8x1xf32>
      tpu.vector_store %arg4[%c0_18, %c0_19, %c0_20], %60 {strides = array<i32>} : memref<1x8x1xf32, #tpu.memory_space<vmem>>, vector<1x8x1xf32>,
    } else {
    }
    return
  }
  func.func @transform_0(%arg0: i32, %arg1: i32) -> (i32, i32, i32) {
    %c0_i32 = arith.constant 0 : i32
    %c0_i32_0 = arith.constant 0 : i32
    %c0_i32_1 = arith.constant 0 : i32
    return %arg0, %c0_i32, %c0_i32_0 : i32, i32, i32
  }
  func.func @transform_1(%arg0: i32, %arg1: i32) -> (i32, i32, i32) {
    %c0_i32 = arith.constant 0 : i32
    %c0_i32_0 = arith.constant 0 : i32
    return %arg0, %c0_i32, %arg1 : i32, i32, i32
  }
  func.func @transform_2(%arg0: i32, %arg1: i32) -> (i32, i32, i32) {
    %c0_i32 = arith.constant 0 : i32
    %c0_i32_0 = arith.constant 0 : i32
    %c0_i32_1 = arith.constant 0 : i32
    return %arg0, %c0_i32, %c0_i32_0 : i32, i32, i32
  }
}

module attributes {stable_mosaic.version = 11 : i64} {
  func.func @assign_encode_kernel(%arg0: i32, %arg1: i32, %arg2: memref<1x8x4xf32, #tpu.memory_space<vmem>>, %arg3: memref<1x4x8xf32, #tpu.memory_space<vmem>>, %arg4: memref<1x8x1xf32, #tpu.memory_space<vmem>>, %arg5: memref<1x4x256xf32, #tpu.memory_space<vmem>>, %arg6: memref<1x5x256xf32, #tpu.memory_space<vmem>>) attributes {dimension_semantics = [#tpu.dimension_semantics<parallel>, #tpu.dimension_semantics<parallel>], iteration_bounds = array<i64: 2, 1>, scalar_prefetch = 0 : i64, scratch_operands = 0 : i64, tpu.core_type = #tpu.core_type<tc>, window_params = [{transform_indices = @transform_0, window_bounds = array<i64: 1, 8, 4>}, {transform_indices = @transform_1, window_bounds = array<i64: 1, 4, 8>}, {transform_indices = @transform_2, window_bounds = array<i64: 1, 8, 1>}, {transform_indices = @transform_3, window_bounds = array<i64: 1, 4, 256>}, {transform_indices = @transform_4, window_bounds = array<i64: 1, 5, 256>}]} {
    %c0 = arith.constant 0 : index
    %c0_0 = arith.constant 0 : index
    %c0_1 = arith.constant 0 : index
    %0 = vector.load %arg2[%c0, %c0_0, %c0_1] : memref<1x8x4xf32, #tpu.memory_space<vmem>>, vector<1x8x4xf32>
    %1 = vector.shape_cast %0 : vector<1x8x4xf32> to vector<8x4xf32>
    %c0_2 = arith.constant 0 : index
    %c0_3 = arith.constant 0 : index
    %c0_4 = arith.constant 0 : index
    %2 = vector.load %arg5[%c0_2, %c0_3, %c0_4] : memref<1x4x256xf32, #tpu.memory_space<vmem>>, vector<1x4x256xf32>
    %3 = vector.shape_cast %2 : vector<1x4x256xf32> to vector<4x256xf32>
    %4 = vector.extract_strided_slice %3 {offsets = [0, 0], sizes = [1, 256], strides = [1, 1]} : vector<4x256xf32> to vector<1x256xf32>
    %5 = vector.extract_strided_slice %3 {offsets = [1, 0], sizes = [1, 256], strides = [1, 1]} : vector<4x256xf32> to vector<1x256xf32>
    %6 = vector.extract_strided_slice %3 {offsets = [2, 0], sizes = [1, 256], strides = [1, 1]} : vector<4x256xf32> to vector<1x256xf32>
    %7 = vector.extract_strided_slice %3 {offsets = [3, 0], sizes = [1, 256], strides = [1, 1]} : vector<4x256xf32> to vector<1x256xf32>
    %8 = vector.extract_strided_slice %1 {offsets = [0, 0], sizes = [8, 1], strides = [1, 1]} : vector<8x4xf32> to vector<8x1xf32>
    %9 = vector.extract_strided_slice %1 {offsets = [0, 1], sizes = [8, 1], strides = [1, 1]} : vector<8x4xf32> to vector<8x1xf32>
    %10 = vector.extract_strided_slice %1 {offsets = [0, 2], sizes = [8, 1], strides = [1, 1]} : vector<8x4xf32> to vector<8x1xf32>
    %11 = vector.extract_strided_slice %1 {offsets = [0, 3], sizes = [8, 1], strides = [1, 1]} : vector<8x4xf32> to vector<8x1xf32>
    %12 = arith.subf %10, %8 : vector<8x1xf32>
    %13 = arith.subf %11, %9 : vector<8x1xf32>
    %14 = arith.mulf %12, %13 : vector<8x1xf32>
    %15 = arith.subf %6, %4 : vector<1x256xf32>
    %16 = arith.subf %7, %5 : vector<1x256xf32>
    %17 = arith.mulf %15, %16 : vector<1x256xf32>
    %18 = vector.broadcast %10 : vector<8x1xf32> to vector<8x256xf32>
    %19 = vector.broadcast %6 : vector<1x256xf32> to vector<8x256xf32>
    %20 = arith.minimumf %18, %19 : vector<8x256xf32>
    %21 = vector.broadcast %8 : vector<8x1xf32> to vector<8x256xf32>
    %22 = vector.broadcast %4 : vector<1x256xf32> to vector<8x256xf32>
    %23 = arith.maximumf %21, %22 : vector<8x256xf32>
    %24 = arith.subf %20, %23 : vector<8x256xf32>
    %cst = arith.constant 0.000000e+00 : f32
    %25 = vector.broadcast %cst : f32 to vector<8x256xf32>
    %26 = arith.maximumf %24, %25 : vector<8x256xf32>
    %27 = vector.broadcast %11 : vector<8x1xf32> to vector<8x256xf32>
    %28 = vector.broadcast %7 : vector<1x256xf32> to vector<8x256xf32>
    %29 = arith.minimumf %27, %28 : vector<8x256xf32>
    %30 = vector.broadcast %9 : vector<8x1xf32> to vector<8x256xf32>
    %31 = vector.broadcast %5 : vector<1x256xf32> to vector<8x256xf32>
    %32 = arith.maximumf %30, %31 : vector<8x256xf32>
    %33 = arith.subf %29, %32 : vector<8x256xf32>
    %cst_5 = arith.constant 0.000000e+00 : f32
    %34 = vector.broadcast %cst_5 : f32 to vector<8x256xf32>
    %35 = arith.maximumf %33, %34 : vector<8x256xf32>
    %36 = arith.mulf %26, %35 : vector<8x256xf32>
    %37 = vector.broadcast %14 : vector<8x1xf32> to vector<8x256xf32>
    %38 = vector.broadcast %17 : vector<1x256xf32> to vector<8x256xf32>
    %39 = arith.addf %37, %38 : vector<8x256xf32>
    %40 = arith.subf %39, %36 : vector<8x256xf32>
    %cst_6 = arith.constant 0.000000e+00 : f32
    %41 = vector.broadcast %cst_6 : f32 to vector<8x256xf32>
    %42 = arith.cmpf ogt, %40, %41 : vector<8x256xf32>
    %43 = arith.divf %36, %40 : vector<8x256xf32>
    %cst_7 = arith.constant 0.000000e+00 : f32
    %44 = vector.broadcast %cst_7 : f32 to vector<8x256xf32>
    %45 = arith.select %42, %43, %44 : vector<8x256xi1>, vector<8x256xf32>
    %cst_8 = arith.constant dense<0xFF800000> : vector<256xf32>
    %46 = vector.multi_reduction <maximumf>, %45, %cst_8 [0] : vector<8x256xf32> to vector<256xf32>
    %47 = vector.shape_cast %46 : vector<256xf32> to vector<1x256xf32>
    %48 = tpu.iota {dimensions = array<i32: 0>} : vector<8x256xi32>
    %49 = vector.broadcast %47 : vector<1x256xf32> to vector<8x256xf32>
    %50 = arith.cmpf oge, %45, %49 : vector<8x256xf32>
    %c8_i32 = arith.constant 8 : i32
    %51 = vector.broadcast %c8_i32 : i32 to vector<8x256xi32>
    %52 = arith.select %50, %48, %51 : vector<8x256xi1>, vector<8x256xi32>
    %cst_9 = arith.constant dense<2147483647> : vector<256xi32>
    %53 = vector.multi_reduction <minsi>, %52, %cst_9 [0] : vector<8x256xi32> to vector<256xi32>
    %54 = vector.shape_cast %53 : vector<256xi32> to vector<1x256xi32>
    %cst_10 = arith.constant 3.000000e-01 : f32
    %55 = vector.broadcast %cst_10 : f32 to vector<1x256xf32>
    %56 = arith.cmpf olt, %47, %55 : vector<1x256xf32>
    %cst_11 = arith.constant 3.000000e-01 : f32
    %57 = vector.broadcast %cst_11 : f32 to vector<1x256xf32>
    %58 = arith.cmpf oge, %47, %57 : vector<1x256xf32>
    %cst_12 = arith.constant 0.699999988 : f32
    %59 = vector.broadcast %cst_12 : f32 to vector<1x256xf32>
    %60 = arith.cmpf olt, %47, %59 : vector<1x256xf32>
    %61 = arith.andi %58, %60 : vector<1x256xi1>
    %c-2_i32 = arith.constant -2 : i32
    %62 = vector.broadcast %c-2_i32 : i32 to vector<1x256xi32>
    %63 = arith.select %61, %62, %54 : vector<1x256xi1>, vector<1x256xi32>
    %c-1_i32 = arith.constant -1 : i32
    %64 = vector.broadcast %c-1_i32 : i32 to vector<1x256xi32>
    %65 = arith.select %56, %64, %63 : vector<1x256xi1>, vector<1x256xi32>
    %c0_13 = arith.constant 0 : index
    %c0_14 = arith.constant 0 : index
    %c0_15 = arith.constant 0 : index
    %66 = vector.load %arg4[%c0_13, %c0_14, %c0_15] : memref<1x8x1xf32, #tpu.memory_space<vmem>>, vector<1x8x1xf32>
    %67 = vector.shape_cast %66 : vector<1x8x1xf32> to vector<8x1xf32>
    %68 = vector.broadcast %67 : vector<8x1xf32> to vector<8x256xf32>
    %69 = arith.cmpf oeq, %45, %68 : vector<8x256xf32>
    %c1_i32 = arith.constant 1 : i32
    %c0_i32 = arith.constant 0 : i32
    %70 = vector.broadcast %c1_i32 : i32 to vector<8x256xi32>
    %71 = vector.broadcast %c0_i32 : i32 to vector<8x256xi32>
    %72 = arith.select %69, %70, %71 : vector<8x256xi1>, vector<8x256xi32>
    %cst_16 = arith.constant dense<-2147483648> : vector<256xi32>
    %73 = vector.multi_reduction <maxsi>, %72, %cst_16 [0] : vector<8x256xi32> to vector<256xi32>
    %74 = vector.shape_cast %73 : vector<256xi32> to vector<1x256xi32>
    %c0_i32_17 = arith.constant 0 : i32
    %75 = vector.broadcast %c0_i32_17 : i32 to vector<1x256xi32>
    %76 = arith.cmpi sgt, %74, %75 : vector<1x256xi32>
    %77 = arith.select %76, %54, %65 : vector<1x256xi1>, vector<1x256xi32>
    %c0_i32_18 = arith.constant 0 : i32
    %78 = vector.broadcast %c0_i32_18 : i32 to vector<1x256xi32>
    %79 = arith.cmpi sge, %77, %78 : vector<1x256xi32>
    %80 = arith.extui %79 : vector<1x256xi1> to vector<1x256xi32>
    %81 = arith.sitofp %80 : vector<1x256xi32> to vector<1x256xf32>
    %c-2_i32_19 = arith.constant -2 : i32
    %82 = vector.broadcast %c-2_i32_19 : i32 to vector<1x256xi32>
    %83 = arith.cmpi eq, %77, %82 : vector<1x256xi32>
    %cst_20 = arith.constant -1.000000e+00 : f32
    %84 = vector.broadcast %cst_20 : f32 to vector<1x256xf32>
    %85 = arith.select %83, %84, %81 : vector<1x256xi1>, vector<1x256xf32>
    %c0_i32_21 = arith.constant 0 : i32
    %86 = vector.broadcast %c0_i32_21 : i32 to vector<1x256xi32>
    %87 = arith.maxsi %77, %86 : vector<1x256xi32>
    %88 = vector.broadcast %87 : vector<1x256xi32> to vector<8x256xi32>
    %89 = arith.cmpi eq, %48, %88 : vector<8x256xi32>
    %90 = arith.extui %89 : vector<8x256xi1> to vector<8x256xi32>
    %91 = arith.sitofp %90 : vector<8x256xi32> to vector<8x256xf32>
    %c0_22 = arith.constant 0 : index
    %c0_23 = arith.constant 0 : index
    %c0_24 = arith.constant 0 : index
    %92 = vector.load %arg3[%c0_22, %c0_23, %c0_24] : memref<1x4x8xf32, #tpu.memory_space<vmem>>, vector<1x4x8xf32>
    %93 = vector.shape_cast %92 : vector<1x4x8xf32> to vector<4x8xf32>
    %cst_25 = arith.constant dense<0.000000e+00> : vector<4x256xf32>
    %94 = tpu.matmul %93, %91, %cst_25 {dimension_numbers = #tpu.dot_dimension_numbers<[1], [0], [0], [1], [0, 0, 1, 1], [], []>} : vector<4x8xf32>, vector<8x256xf32>, vector<4x256xf32> -> vector<4x256xf32>
    %95 = vector.extract_strided_slice %3 {offsets = [0, 0], sizes = [1, 256], strides = [1, 1]} : vector<4x256xf32> to vector<1x256xf32>
    %96 = vector.extract_strided_slice %3 {offsets = [1, 0], sizes = [1, 256], strides = [1, 1]} : vector<4x256xf32> to vector<1x256xf32>
    %97 = vector.extract_strided_slice %3 {offsets = [2, 0], sizes = [1, 256], strides = [1, 1]} : vector<4x256xf32> to vector<1x256xf32>
    %98 = vector.extract_strided_slice %3 {offsets = [3, 0], sizes = [1, 256], strides = [1, 1]} : vector<4x256xf32> to vector<1x256xf32>
    %99 = vector.extract_strided_slice %94 {offsets = [0, 0], sizes = [1, 256], strides = [1, 1]} : vector<4x256xf32> to vector<1x256xf32>
    %100 = vector.extract_strided_slice %94 {offsets = [1, 0], sizes = [1, 256], strides = [1, 1]} : vector<4x256xf32> to vector<1x256xf32>
    %101 = vector.extract_strided_slice %94 {offsets = [2, 0], sizes = [1, 256], strides = [1, 1]} : vector<4x256xf32> to vector<1x256xf32>
    %102 = vector.extract_strided_slice %94 {offsets = [3, 0], sizes = [1, 256], strides = [1, 1]} : vector<4x256xf32> to vector<1x256xf32>
    %103 = arith.subf %97, %95 : vector<1x256xf32>
    %104 = arith.subf %98, %96 : vector<1x256xf32>
    %cst_26 = arith.constant 5.000000e-01 : f32
    %105 = vector.broadcast %cst_26 : f32 to vector<1x256xf32>
    %106 = arith.mulf %105, %103 : vector<1x256xf32>
    %107 = arith.addf %95, %106 : vector<1x256xf32>
    %cst_27 = arith.constant 5.000000e-01 : f32
    %108 = vector.broadcast %cst_27 : f32 to vector<1x256xf32>
    %109 = arith.mulf %108, %104 : vector<1x256xf32>
    %110 = arith.addf %96, %109 : vector<1x256xf32>
    %111 = arith.subf %101, %99 : vector<1x256xf32>
    %112 = arith.subf %102, %100 : vector<1x256xf32>
    %cst_28 = arith.constant 5.000000e-01 : f32
    %113 = vector.broadcast %cst_28 : f32 to vector<1x256xf32>
    %114 = arith.mulf %113, %111 : vector<1x256xf32>
    %115 = arith.addf %99, %114 : vector<1x256xf32>
    %cst_29 = arith.constant 5.000000e-01 : f32
    %116 = vector.broadcast %cst_29 : f32 to vector<1x256xf32>
    %117 = arith.mulf %116, %112 : vector<1x256xf32>
    %118 = arith.addf %100, %117 : vector<1x256xf32>
    %c0_30 = arith.constant 0 : index
    %c0_31 = arith.constant 0 : index
    %c0_32 = arith.constant 0 : index
    %119 = vector.load %arg6[%c0_30, %c0_31, %c0_32] : memref<1x5x256xf32, #tpu.memory_space<vmem>>, vector<1x1x256xf32>
    %120 = vector.shape_cast %119 : vector<1x1x256xf32> to vector<1x256xf32>
    %121 = vector.shape_cast %85 : vector<1x256xf32> to vector<1x1x256xf32>
    tpu.vector_store %arg6[%c0_30, %c0_31, %c0_32], %121 {strides = array<i32>} : memref<1x5x256xf32, #tpu.memory_space<vmem>>, vector<1x1x256xf32>,
    %122 = arith.subf %115, %107 : vector<1x256xf32>
    %cst_33 = arith.constant 1.000000e+00 : f32
    %123 = vector.broadcast %cst_33 : f32 to vector<1x256xf32>
    %124 = arith.mulf %123, %122 : vector<1x256xf32>
    %125 = arith.divf %124, %103 : vector<1x256xf32>
    %c0_34 = arith.constant 0 : index
    %c1 = arith.constant 1 : index
    %c0_35 = arith.constant 0 : index
    %126 = vector.load %arg6[%c0_34, %c1, %c0_35] : memref<1x5x256xf32, #tpu.memory_space<vmem>>, vector<1x1x256xf32>
    %127 = vector.shape_cast %126 : vector<1x1x256xf32> to vector<1x256xf32>
    %128 = vector.shape_cast %125 : vector<1x256xf32> to vector<1x1x256xf32>
    tpu.vector_store %arg6[%c0_34, %c1, %c0_35], %128 {strides = array<i32>} : memref<1x5x256xf32, #tpu.memory_space<vmem>>, vector<1x1x256xf32>,
    %129 = arith.subf %118, %110 : vector<1x256xf32>
    %cst_36 = arith.constant 1.000000e+00 : f32
    %130 = vector.broadcast %cst_36 : f32 to vector<1x256xf32>
    %131 = arith.mulf %130, %129 : vector<1x256xf32>
    %132 = arith.divf %131, %104 : vector<1x256xf32>
    %c0_37 = arith.constant 0 : index
    %c2 = arith.constant 2 : index
    %c0_38 = arith.constant 0 : index
    %133 = vector.load %arg6[%c0_37, %c2, %c0_38] : memref<1x5x256xf32, #tpu.memory_space<vmem>>, vector<1x1x256xf32>
    %134 = vector.shape_cast %133 : vector<1x1x256xf32> to vector<1x256xf32>
    %135 = vector.shape_cast %132 : vector<1x256xf32> to vector<1x1x256xf32>
    tpu.vector_store %arg6[%c0_37, %c2, %c0_38], %135 {strides = array<i32>} : memref<1x5x256xf32, #tpu.memory_space<vmem>>, vector<1x1x256xf32>,
    %136 = arith.divf %111, %103 : vector<1x256xf32>
    %137 = math.log %136 : vector<1x256xf32>
    %cst_39 = arith.constant 1.000000e+00 : f32
    %138 = vector.broadcast %cst_39 : f32 to vector<1x256xf32>
    %139 = arith.mulf %138, %137 : vector<1x256xf32>
    %c0_40 = arith.constant 0 : index
    %c3 = arith.constant 3 : index
    %c0_41 = arith.constant 0 : index
    %140 = vector.load %arg6[%c0_40, %c3, %c0_41] : memref<1x5x256xf32, #tpu.memory_space<vmem>>, vector<1x1x256xf32>
    %141 = vector.shape_cast %140 : vector<1x1x256xf32> to vector<1x256xf32>
    %142 = vector.shape_cast %139 : vector<1x256xf32> to vector<1x1x256xf32>
    tpu.vector_store %arg6[%c0_40, %c3, %c0_41], %142 {strides = array<i32>} : memref<1x5x256xf32, #tpu.memory_space<vmem>>, vector<1x1x256xf32>,
    %143 = arith.divf %112, %104 : vector<1x256xf32>
    %144 = math.log %143 : vector<1x256xf32>
    %cst_42 = arith.constant 1.000000e+00 : f32
    %145 = vector.broadcast %cst_42 : f32 to vector<1x256xf32>
    %146 = arith.mulf %145, %144 : vector<1x256xf32>
    %c0_43 = arith.constant 0 : index
    %c4 = arith.constant 4 : index
    %c0_44 = arith.constant 0 : index
    %147 = vector.load %arg6[%c0_43, %c4, %c0_44] : memref<1x5x256xf32, #tpu.memory_space<vmem>>, vector<1x1x256xf32>
    %148 = vector.shape_cast %147 : vector<1x1x256xf32> to vector<1x256xf32>
    %149 = vector.shape_cast %146 : vector<1x256xf32> to vector<1x1x256xf32>
    tpu.vector_store %arg6[%c0_43, %c4, %c0_44], %149 {strides = array<i32>} : memref<1x5x256xf32, #tpu.memory_space<vmem>>, vector<1x1x256xf32>,
    return
  }
  func.func @transform_0(%arg0: i32, %arg1: i32) -> (i32, i32, i32) {
    %c0_i32 = arith.constant 0 : i32
    %c0_i32_0 = arith.constant 0 : i32
    %c0_i32_1 = arith.constant 0 : i32
    return %arg0, %c0_i32, %c0_i32_0 : i32, i32, i32
  }
  func.func @transform_1(%arg0: i32, %arg1: i32) -> (i32, i32, i32) {
    %c0_i32 = arith.constant 0 : i32
    %c0_i32_0 = arith.constant 0 : i32
    %c0_i32_1 = arith.constant 0 : i32
    return %arg0, %c0_i32, %c0_i32_0 : i32, i32, i32
  }
  func.func @transform_2(%arg0: i32, %arg1: i32) -> (i32, i32, i32) {
    %c0_i32 = arith.constant 0 : i32
    %c0_i32_0 = arith.constant 0 : i32
    %c0_i32_1 = arith.constant 0 : i32
    return %arg0, %c0_i32, %c0_i32_0 : i32, i32, i32
  }
  func.func @transform_3(%arg0: i32, %arg1: i32) -> (i32, i32, i32) {
    %c0_i32 = arith.constant 0 : i32
    %c0_i32_0 = arith.constant 0 : i32
    return %arg0, %c0_i32, %arg1 : i32, i32, i32
  }
  func.func @transform_4(%arg0: i32, %arg1: i32) -> (i32, i32, i32) {
    %c0_i32 = arith.constant 0 : i32
    %c0_i32_0 = arith.constant 0 : i32
    return %arg0, %c0_i32, %arg1 : i32, i32, i32
  }
}

module attributes {stable_mosaic.version = 11 : i64} {
  func.func @loss_kernel(%arg0: i32, %arg1: i32, %arg2: memref<1x3x256xf32, #tpu.memory_space<vmem>>, %arg3: memref<1x4x256xf32, #tpu.memory_space<vmem>>, %arg4: memref<1x5x256xf32, #tpu.memory_space<vmem>>, %arg5: memref<1x1x128xf32, #tpu.memory_space<vmem>>) attributes {dimension_semantics = [#tpu.dimension_semantics<parallel>, #tpu.dimension_semantics<parallel>], iteration_bounds = array<i64: 2, 1>, scalar_prefetch = 0 : i64, scratch_operands = 0 : i64, tpu.core_type = #tpu.core_type<tc>, window_params = [{transform_indices = @transform_0, window_bounds = array<i64: 1, 3, 256>}, {transform_indices = @transform_1, window_bounds = array<i64: 1, 4, 256>}, {transform_indices = @transform_2, window_bounds = array<i64: 1, 5, 256>}, {transform_indices = @transform_3, window_bounds = array<i64: 1, 1, 128>}]} {
    %c0 = arith.constant 0 : index
    %c0_0 = arith.constant 0 : index
    %c0_1 = arith.constant 0 : index
    %0 = vector.load %arg2[%c0, %c0_0, %c0_1] : memref<1x3x256xf32, #tpu.memory_space<vmem>>, vector<1x3x256xf32>
    %1 = vector.shape_cast %0 : vector<1x3x256xf32> to vector<3x256xf32>
    %c0_2 = arith.constant 0 : index
    %c0_3 = arith.constant 0 : index
    %c0_4 = arith.constant 0 : index
    %2 = vector.load %arg3[%c0_2, %c0_3, %c0_4] : memref<1x4x256xf32, #tpu.memory_space<vmem>>, vector<1x4x256xf32>
    %3 = vector.shape_cast %2 : vector<1x4x256xf32> to vector<4x256xf32>
    %c0_5 = arith.constant 0 : index
    %c0_6 = arith.constant 0 : index
    %c0_7 = arith.constant 0 : index
    %4 = vector.load %arg4[%c0_5, %c0_6, %c0_7] : memref<1x5x256xf32, #tpu.memory_space<vmem>>, vector<1x5x256xf32>
    %5 = vector.shape_cast %4 : vector<1x5x256xf32> to vector<5x256xf32>
    %6 = vector.extract_strided_slice %1 {offsets = [0, 0], sizes = [1, 256], strides = [1, 1]} : vector<3x256xf32> to vector<1x256xf32>
    %7 = vector.extract_strided_slice %1 {offsets = [1, 0], sizes = [1, 256], strides = [1, 1]} : vector<3x256xf32> to vector<1x256xf32>
    %8 = vector.extract_strided_slice %1 {offsets = [2, 0], sizes = [1, 256], strides = [1, 1]} : vector<3x256xf32> to vector<1x256xf32>
    %9 = vector.extract_strided_slice %5 {offsets = [0, 0], sizes = [1, 256], strides = [1, 1]} : vector<5x256xf32> to vector<1x256xf32>
    %cst = arith.constant 0.000000e+00 : f32
    %10 = vector.broadcast %cst : f32 to vector<1x256xf32>
    %11 = vector.extract_strided_slice %3 {offsets = [0, 0], sizes = [1, 256], strides = [1, 1]} : vector<4x256xf32> to vector<1x256xf32>
    %12 = vector.extract_strided_slice %5 {offsets = [1, 0], sizes = [1, 256], strides = [1, 1]} : vector<5x256xf32> to vector<1x256xf32>
    %13 = arith.subf %11, %12 : vector<1x256xf32>
    %14 = math.absf %13 : vector<1x256xf32>
    %cst_8 = arith.constant 0.111111112 : f32
    %15 = vector.broadcast %cst_8 : f32 to vector<1x256xf32>
    %16 = arith.cmpf olt, %14, %15 : vector<1x256xf32>
    %cst_9 = arith.constant 5.000000e-01 : f32
    %17 = vector.broadcast %cst_9 : f32 to vector<1x256xf32>
    %18 = arith.mulf %17, %13 : vector<1x256xf32>
    %19 = arith.mulf %18, %13 : vector<1x256xf32>
    %cst_10 = arith.constant 0.111111112 : f32
    %20 = vector.broadcast %cst_10 : f32 to vector<1x256xf32>
    %21 = arith.divf %19, %20 : vector<1x256xf32>
    %cst_11 = arith.constant 0.055555556 : f32
    %22 = vector.broadcast %cst_11 : f32 to vector<1x256xf32>
    %23 = arith.subf %14, %22 : vector<1x256xf32>
    %24 = arith.select %16, %21, %23 : vector<1x256xi1>, vector<1x256xf32>
    %cst_12 = arith.constant 0.000000e+00 : f32
    %25 = vector.broadcast %cst_12 : f32 to vector<1x256xf32>
    %26 = arith.cmpf ogt, %7, %25 : vector<1x256xf32>
    %cst_13 = arith.constant 0.000000e+00 : f32
    %27 = vector.broadcast %cst_13 : f32 to vector<1x256xf32>
    %28 = arith.select %26, %24, %27 : vector<1x256xi1>, vector<1x256xf32>
    %29 = arith.addf %10, %28 : vector<1x256xf32>
    %30 = vector.extract_strided_slice %3 {offsets = [1, 0], sizes = [1, 256], strides = [1, 1]} : vector<4x256xf32> to vector<1x256xf32>
    %31 = vector.extract_strided_slice %5 {offsets = [2, 0], sizes = [1, 256], strides = [1, 1]} : vector<5x256xf32> to vector<1x256xf32>
    %32 = arith.subf %30, %31 : vector<1x256xf32>
    %33 = math.absf %32 : vector<1x256xf32>
    %cst_14 = arith.constant 0.111111112 : f32
    %34 = vector.broadcast %cst_14 : f32 to vector<1x256xf32>
    %35 = arith.cmpf olt, %33, %34 : vector<1x256xf32>
    %cst_15 = arith.constant 5.000000e-01 : f32
    %36 = vector.broadcast %cst_15 : f32 to vector<1x256xf32>
    %37 = arith.mulf %36, %32 : vector<1x256xf32>
    %38 = arith.mulf %37, %32 : vector<1x256xf32>
    %cst_16 = arith.constant 0.111111112 : f32
    %39 = vector.broadcast %cst_16 : f32 to vector<1x256xf32>
    %40 = arith.divf %38, %39 : vector<1x256xf32>
    %cst_17 = arith.constant 0.055555556 : f32
    %41 = vector.broadcast %cst_17 : f32 to vector<1x256xf32>
    %42 = arith.subf %33, %41 : vector<1x256xf32>
    %43 = arith.select %35, %40, %42 : vector<1x256xi1>, vector<1x256xf32>
    %cst_18 = arith.constant 0.000000e+00 : f32
    %44 = vector.broadcast %cst_18 : f32 to vector<1x256xf32>
    %45 = arith.cmpf ogt, %7, %44 : vector<1x256xf32>
    %cst_19 = arith.constant 0.000000e+00 : f32
    %46 = vector.broadcast %cst_19 : f32 to vector<1x256xf32>
    %47 = arith.select %45, %43, %46 : vector<1x256xi1>, vector<1x256xf32>
    %48 = arith.addf %29, %47 : vector<1x256xf32>
    %49 = vector.extract_strided_slice %3 {offsets = [2, 0], sizes = [1, 256], strides = [1, 1]} : vector<4x256xf32> to vector<1x256xf32>
    %50 = vector.extract_strided_slice %5 {offsets = [3, 0], sizes = [1, 256], strides = [1, 1]} : vector<5x256xf32> to vector<1x256xf32>
    %51 = arith.subf %49, %50 : vector<1x256xf32>
    %52 = math.absf %51 : vector<1x256xf32>
    %cst_20 = arith.constant 0.111111112 : f32
    %53 = vector.broadcast %cst_20 : f32 to vector<1x256xf32>
    %54 = arith.cmpf olt, %52, %53 : vector<1x256xf32>
    %cst_21 = arith.constant 5.000000e-01 : f32
    %55 = vector.broadcast %cst_21 : f32 to vector<1x256xf32>
    %56 = arith.mulf %55, %51 : vector<1x256xf32>
    %57 = arith.mulf %56, %51 : vector<1x256xf32>
    %cst_22 = arith.constant 0.111111112 : f32
    %58 = vector.broadcast %cst_22 : f32 to vector<1x256xf32>
    %59 = arith.divf %57, %58 : vector<1x256xf32>
    %cst_23 = arith.constant 0.055555556 : f32
    %60 = vector.broadcast %cst_23 : f32 to vector<1x256xf32>
    %61 = arith.subf %52, %60 : vector<1x256xf32>
    %62 = arith.select %54, %59, %61 : vector<1x256xi1>, vector<1x256xf32>
    %cst_24 = arith.constant 0.000000e+00 : f32
    %63 = vector.broadcast %cst_24 : f32 to vector<1x256xf32>
    %64 = arith.cmpf ogt, %7, %63 : vector<1x256xf32>
    %cst_25 = arith.constant 0.000000e+00 : f32
    %65 = vector.broadcast %cst_25 : f32 to vector<1x256xf32>
    %66 = arith.select %64, %62, %65 : vector<1x256xi1>, vector<1x256xf32>
    %67 = arith.addf %48, %66 : vector<1x256xf32>
    %68 = vector.extract_strided_slice %3 {offsets = [3, 0], sizes = [1, 256], strides = [1, 1]} : vector<4x256xf32> to vector<1x256xf32>
    %69 = vector.extract_strided_slice %5 {offsets = [4, 0], sizes = [1, 256], strides = [1, 1]} : vector<5x256xf32> to vector<1x256xf32>
    %70 = arith.subf %68, %69 : vector<1x256xf32>
    %71 = math.absf %70 : vector<1x256xf32>
    %cst_26 = arith.constant 0.111111112 : f32
    %72 = vector.broadcast %cst_26 : f32 to vector<1x256xf32>
    %73 = arith.cmpf olt, %71, %72 : vector<1x256xf32>
    %cst_27 = arith.constant 5.000000e-01 : f32
    %74 = vector.broadcast %cst_27 : f32 to vector<1x256xf32>
    %75 = arith.mulf %74, %70 : vector<1x256xf32>
    %76 = arith.mulf %75, %70 : vector<1x256xf32>
    %cst_28 = arith.constant 0.111111112 : f32
    %77 = vector.broadcast %cst_28 : f32 to vector<1x256xf32>
    %78 = arith.divf %76, %77 : vector<1x256xf32>
    %cst_29 = arith.constant 0.055555556 : f32
    %79 = vector.broadcast %cst_29 : f32 to vector<1x256xf32>
    %80 = arith.subf %71, %79 : vector<1x256xf32>
    %81 = arith.select %73, %78, %80 : vector<1x256xi1>, vector<1x256xf32>
    %cst_30 = arith.constant 0.000000e+00 : f32
    %82 = vector.broadcast %cst_30 : f32 to vector<1x256xf32>
    %83 = arith.cmpf ogt, %7, %82 : vector<1x256xf32>
    %cst_31 = arith.constant 0.000000e+00 : f32
    %84 = vector.broadcast %cst_31 : f32 to vector<1x256xf32>
    %85 = arith.select %83, %81, %84 : vector<1x256xi1>, vector<1x256xf32>
    %86 = arith.addf %67, %85 : vector<1x256xf32>
    %cst_32 = arith.constant dense<0.000000e+00> : vector<1xf32>
    %87 = vector.multi_reduction <add>, %86, %cst_32 [1] : vector<1x256xf32> to vector<1xf32>
    %88 = vector.shape_cast %87 : vector<1xf32> to vector<1x1xf32>
    %cst_33 = arith.constant 0.000000e+00 : f32
    %89 = vector.broadcast %cst_33 : f32 to vector<1x256xf32>
    %90 = arith.maximumf %6, %89 : vector<1x256xf32>
    %91 = arith.mulf %6, %9 : vector<1x256xf32>
    %92 = arith.subf %90, %91 : vector<1x256xf32>
    %93 = math.absf %6 : vector<1x256xf32>
    %cst_34 = arith.constant 0.000000e+00 : f32
    %94 = vector.broadcast %cst_34 : f32 to vector<1x256xf32>
    %95 = arith.subf %94, %93 : vector<1x256xf32>
    %96 = math.exp %95 : vector<1x256xf32>
    %cst_35 = arith.constant 1.000000e+00 : f32
    %97 = vector.broadcast %cst_35 : f32 to vector<1x256xf32>
    %98 = arith.addf %97, %96 : vector<1x256xf32>
    %99 = math.log %98 : vector<1x256xf32>
    %100 = arith.addf %92, %99 : vector<1x256xf32>
    %cst_36 = arith.constant 0.000000e+00 : f32
    %101 = vector.broadcast %cst_36 : f32 to vector<1x256xf32>
    %102 = arith.cmpf ogt, %8, %101 : vector<1x256xf32>
    %cst_37 = arith.constant 0.000000e+00 : f32
    %103 = vector.broadcast %cst_37 : f32 to vector<1x256xf32>
    %104 = arith.select %102, %100, %103 : vector<1x256xi1>, vector<1x256xf32>
    %cst_38 = arith.constant dense<0.000000e+00> : vector<1xf32>
    %105 = vector.multi_reduction <add>, %104, %cst_38 [1] : vector<1x256xf32> to vector<1xf32>
    %106 = vector.shape_cast %105 : vector<1xf32> to vector<1x1xf32>
    %cst_39 = arith.constant dense<0.000000e+00> : vector<1xf32>
    %107 = vector.multi_reduction <add>, %8, %cst_39 [1] : vector<1x256xf32> to vector<1xf32>
    %108 = vector.shape_cast %107 : vector<1xf32> to vector<1x1xf32>
    %109 = tpu.iota {dimensions = array<i32: 1>} : vector<1x128xi32>
    %c0_i32 = arith.constant 0 : i32
    %110 = vector.broadcast %c0_i32 : i32 to vector<1x128xi32>
    %111 = arith.cmpi eq, %109, %110 : vector<1x128xi32>
    %c1_i32 = arith.constant 1 : i32
    %112 = vector.broadcast %c1_i32 : i32 to vector<1x128xi32>
    %113 = arith.cmpi eq, %109, %112 : vector<1x128xi32>
    %c2_i32 = arith.constant 2 : i32
    %114 = vector.broadcast %c2_i32 : i32 to vector<1x128xi32>
    %115 = arith.cmpi eq, %109, %114 : vector<1x128xi32>
    %cst_40 = arith.constant 0.000000e+00 : f32
    %116 = vector.shape_cast %108 : vector<1x1xf32> to vector<1x1xf32>
    %117 = vector.broadcast %116 : vector<1x1xf32> to vector<1x128xf32>
    %118 = vector.broadcast %cst_40 : f32 to vector<1x128xf32>
    %119 = arith.select %115, %117, %118 : vector<1x128xi1>, vector<1x128xf32>
    %120 = vector.shape_cast %106 : vector<1x1xf32> to vector<1x1xf32>
    %121 = vector.broadcast %120 : vector<1x1xf32> to vector<1x128xf32>
    %122 = arith.select %113, %121, %119 : vector<1x128xi1>, vector<1x128xf32>
    %123 = vector.shape_cast %88 : vector<1x1xf32> to vector<1x1xf32>
    %124 = vector.broadcast %123 : vector<1x1xf32> to vector<1x128xf32>
    %125 = arith.select %111, %124, %122 : vector<1x128xi1>, vector<1x128xf32>
    %c0_41 = arith.constant 0 : index
    %c0_42 = arith.constant 0 : index
    %c0_43 = arith.constant 0 : index
    %126 = vector.load %arg5[%c0_41, %c0_42, %c0_43] : memref<1x1x128xf32, #tpu.memory_space<vmem>>, vector<1x1x128xf32>
    %127 = vector.shape_cast %126 : vector<1x1x128xf32> to vector<1x128xf32>
    %128 = vector.shape_cast %125 : vector<1x128xf32> to vector<1x1x128xf32>
    tpu.vector_store %arg5[%c0_41, %c0_42, %c0_43], %128 {strides = array<i32>} : memref<1x1x128xf32, #tpu.memory_space<vmem>>, vector<1x1x128xf32>,
    return
  }
  func.func @transform_0(%arg0: i32, %arg1: i32) -> (i32, i32, i32) {
    %c0_i32 = arith.constant 0 : i32
    %c0_i32_0 = arith.constant 0 : i32
    return %arg0, %c0_i32, %arg1 : i32, i32, i32
  }
  func.func @transform_1(%arg0: i32, %arg1: i32) -> (i32, i32, i32) {
    %c0_i32 = arith.constant 0 : i32
    %c0_i32_0 = arith.constant 0 : i32
    return %arg0, %c0_i32, %arg1 : i32, i32, i32
  }
  func.func @transform_2(%arg0: i32, %arg1: i32) -> (i32, i32, i32) {
    %c0_i32 = arith.constant 0 : i32
    %c0_i32_0 = arith.constant 0 : i32
    return %arg0, %c0_i32, %arg1 : i32, i32, i32
  }
  func.func @transform_3(%arg0: i32, %arg1: i32) -> (i32, i32, i32) {
    %c1_i32 = arith.constant 1 : i32
    %0 = arith.muli %arg0, %c1_i32 : i32
    %1 = arith.addi %0, %arg1 : i32
    %c0_i32 = arith.constant 0 : i32
    %c0_i32_0 = arith.constant 0 : i32
    %c0_i32_1 = arith.constant 0 : i32
    return %1, %c0_i32, %c0_i32_0 : i32, i32, i32
  }
}

</mosaic_0001>

<llo_original>
// kernel: rpn_loss_forward.3
$region0: #{rpn_loss_forward.3}
  #allocation0 [shape = 'u32[]', space=smem, size = 0x4, offset = 0x4, fixed_abs, tag = 'smem constant byte address 0x4 - core index']
  #allocation1 [shape = 'u32[144,128]{1,0:T(1,128)}', space=vmem, size = 0x12000, scoped, tag = 'internal scratch']
  #allocation2 [shape = 'f32[8,1]{1,0:T(8,128)}', space=vmem, size = 0x1000, scoped, tag = 'scratch operand']
  %s0 = inlined_call_operand.vmem [shape: f32[2,8,4], index: 0, kind: input, shape index: {}]
  %s1 = inlined_call_operand.vmem [shape: f32[2,4,256], index: 1, kind: input, shape index: {}]
  %s2 = inlined_call_operand.vmem [shape: f32[2,8,1], index: 2, kind: output, shape index: {}]
  %s3 = sld [smem:[#allocation0]]
  $region49: #{rpn_loss_forward.3} parent=0
    _
  %s5 = ssub.s32 1, %s3
  %s6 = scalar_select 0, %s5, %s3
  loop: start=0, step=1, limit=4
  $region2: #{rpn_loss_forward.3} parent=0 // loop_pre_header
    _
  $region3: #{rpn_loss_forward.3} parent=0 // loop_header
    %s8 = sphi 0, %s12
    %p9 = scmp.ge.s32.totalorder %s8, 4
    %s15 = sphi 0, %s27
    %s16 = sphi 0, %s23
    %s17 = sphi 0, %s15
    %s18 = sphi 0, %s16
    %s19 = sphi 0, %s17
    %s20 = sphi 0, %s18
    %s30 = sphi 0, %s32
    %s33 = sphi 0, %s30
    %s34 = sphi 0, %s33
    %s50 = sphi 0, %s34
    %s58 = sphi 0, %s60
    %s61 = sphi 0, %s58
    %s62 = sphi 0, %s61
    %s78 = sphi 0, %s62
    %s84 = sphi 0, %s86
    %s87 = sphi 0, %s84
    %s88 = sphi 0, %s87
    %s104 = sphi 0, %s88
  $region4: #{rpn_loss_forward.3} parent=0 // loop_header_branch
    %11 = sbr.rel (%p9) target = $region8
  $region5: #{rpn_loss_forward.3} parent=0 // loop_body
    %s13 = ssub.s32 %s8, 1
    %s14 = ssub.s32 %s8, 2
    %s21 = sadd.s32 1, %s16
    %p22 = scmp.ge.s32.totalorder %s21, 1
    %s23 = scalar_select %p22, 0, %s21
    %s24 = sadd.s32 1, %s15
    %s25 = scalar_select %p22, %s24, %s15
    %p26 = scmp.ge.s32.totalorder %s25, 2
    %s27 = scalar_select %p26, 0, %s25
    %s28 = ssub.s32 %s15, %s27
    %p29 = scmp.eq.s32.totalorder %s28, 0
    %s31 = sadd.s32 %s30, 1
    %s32 = scalar_select %p29, %s30, %s31
    %p35 = pneg %p29
    %p36 = scmp.eq.s32.totalorder %s8, 1
    %p37 = por %p35, %p36
    %p38 = scmp.ne.s32.totalorder %s30, %s33
    %p39 = scmp.eq.s32.totalorder %s8, 0
    %p40 = por %p38, %p39
    %p41 = scmp.ne.s32.totalorder %s30, %s33
    %p42 = scmp.eq.s32.totalorder %s13, 1
    %p43 = por %p41, %p42
    %p44 = scmp.ne.s32.totalorder %s33, %s34
    %p45 = scmp.eq.s32.totalorder %s13, 0
    %p46 = por %p44, %p45
    %p47 = scmp.ne.s32.totalorder %s33, %s34
    %p48 = scmp.eq.s32.totalorder %s14, 1
    %p49 = por %p47, %p48
    %p51 = scmp.ne.s32.totalorder %s34, %s50
    %p52 = scmp.eq.s32.totalorder %s14, 0
    %p53 = por %p51, %p52
    %s54 = ssub.s32 %s15, %s27
    %s55 = ssub.s32 %s16, %s23
    %s56 = sor.u32 %s54, %s55
    %p57 = scmp.eq.s32.totalorder %s56, 0
    %s59 = sadd.s32 %s58, 1
    %s60 = scalar_select %p57, %s58, %s59
    %p63 = pneg %p57
    %p64 = scmp.eq.s32.totalorder %s8, 1
    %p65 = por %p63, %p64
    %p66 = scmp.ne.s32.totalorder %s58, %s61
    %p67 = scmp.eq.s32.totalorder %s8, 0
    %p68 = por %p66, %p67
    %p69 = scmp.ne.s32.totalorder %s58, %s61
    %p70 = scmp.eq.s32.totalorder %s13, 1
    %p71 = por %p69, %p70
    %p72 = scmp.ne.s32.totalorder %s61, %s62
    %p73 = scmp.eq.s32.totalorder %s13, 0
    %p74 = por %p72, %p73
    %p75 = scmp.ne.s32.totalorder %s61, %s62
    %p76 = scmp.eq.s32.totalorder %s14, 1
    %p77 = por %p75, %p76
    %p79 = scmp.ne.s32.totalorder %s62, %s78
    %p80 = scmp.eq.s32.totalorder %s14, 0
    %p81 = por %p79, %p80
    %s82 = ssub.s32 %s15, %s27
    %p83 = scmp.eq.s32.totalorder %s82, 0
    %s85 = sadd.s32 %s84, 1
    %s86 = scalar_select %p83, %s84, %s85
    %p89 = pneg %p83
    %p90 = scmp.eq.s32.totalorder %s8, 1
    %p91 = por %p89, %p90
    %p92 = scmp.ne.s32.totalorder %s84, %s87
    %p93 = scmp.eq.s32.totalorder %s8, 0
    %p94 = por %p92, %p93
    %p95 = scmp.ne.s32.totalorder %s84, %s87
    %p96 = scmp.eq.s32.totalorder %s13, 1
    %p97 = por %p95, %p96
    %p98 = scmp.ne.s32.totalorder %s87, %s88
    %p99 = scmp.eq.s32.totalorder %s13, 0
    %p100 = por %p98, %p99
    %p101 = scmp.ne.s32.totalorder %s87, %s88
    %p102 = scmp.eq.s32.totalorder %s14, 1
    %p103 = por %p101, %p102
    %p105 = scmp.ne.s32.totalorder %s88, %s104
    %p106 = scmp.eq.s32.totalorder %s14, 0
    %p107 = por %p105, %p106
    %p108 = scmp.le.s32.totalorder 1, %s8
    %p109 = scmp.lt.s32.totalorder %s8, 3
    %p110 = pnand %p108, %p109
    %p111 = pneg %p110
    // Predicated region
    $region9: #{rpn_loss_forward.3} parent=5 // pred_check
      _
    $region10: #{rpn_loss_forward.3} parent=5 // pred_check_branch
      %113 = sbr.rel (%p110) target = $region12
    $region11: #{rpn_loss_forward.3} parent=5 // pred_region
      %s114 = ssub.s32 %s8, 1
    $region12: #{rpn_loss_forward.3} parent=5 // pred_fallthru
      _
    %p115 = scmp.lt.s32.totalorder %s8, 2
    // Predicated region
    $region13: #{rpn_loss_forward.3} parent=5 // pred_check
      %p116 = pneg %p115
    $region14: #{rpn_loss_forward.3} parent=5 // pred_check_branch
      %118 = sbr.rel (%p116) target = $region16
    $region15: #{rpn_loss_forward.3} parent=5 // pred_region
      // Predicated region
      $region17: #{rpn_loss_forward.3} parent=15 // pred_check
        %p119 = pneg %p40
      $region18: #{rpn_loss_forward.3} parent=15 // pred_check_branch
        %121 = sbr.rel (%p119) target = $region20
      $region19: #{rpn_loss_forward.3} parent=15 // pred_region
        %p122 = scmp.lt.s32.totalorder %s15, 1
        %s123 = scalar_select %p122, %s15, 1
        %s124 = smul.addr %s123, 8
        %s125 = scalar_lea.vmem %s0, %s124
      $region20: #{rpn_loss_forward.3} parent=15 // pred_fallthru
        _
      // Predicated region
      $region21: #{rpn_loss_forward.3} parent=15 // pred_check
        %p126 = pneg %p68
      $region22: #{rpn_loss_forward.3} parent=15 // pred_check_branch
        %128 = sbr.rel (%p126) target = $region24
      $region23: #{rpn_loss_forward.3} parent=15 // pred_region
        %s129 = smul.u32 2, %s16
        %p130 = scmp.lt.s32.totalorder %s15, 1
        %s131 = scalar_select %p130, %s15, 1
        %p132 = scmp.lt.s32.totalorder %s129, 1
        %s133 = scalar_select %p132, %s129, 1
        %s134 = smul.addr %s131, 2
        %s135 = sadd.s32 %s133, %s134
        %s136 = smul.addr %s135, 4
        %s137 = scalar_lea.vmem %s1, %s136
        %s138 = smul.u32 2, %s16
      $region24: #{rpn_loss_forward.3} parent=15 // pred_fallthru
        _
    $region16: #{rpn_loss_forward.3} parent=5 // pred_fallthru
      _
    %p139 = scmp.le.s32.totalorder 1, %s8
    %p140 = scmp.lt.s32.totalorder %s8, 3
    %p141 = pnand %p139, %p140
    %p142 = pneg %p141
    // Predicated region
    $region25: #{rpn_loss_forward.3} parent=5 // pred_check
      _
    $region26: #{rpn_loss_forward.3} parent=5 // pred_check_branch
      %144 = sbr.rel (%p141) target = $region28
    $region27: #{rpn_loss_forward.3} parent=5 // pred_region
      %s145 = ssub.s32 %s8, 1
      %p146 = scmp.lt.s32.totalorder %s17, 1
      %s147 = scalar_select %p146, %s17, 1
      %s148 = smul.addr %s147, 8
      %s149 = scalar_lea.vmem %s0, %s148
      %p150 = pneg %p46
      %p151 = pneg %p43
      %s152 = smul.u32 2, %s18
      %p153 = scmp.lt.s32.totalorder %s17, 1
      %s154 = scalar_select %p153, %s17, 1
      %p155 = scmp.lt.s32.totalorder %s152, 1
      %s156 = scalar_select %p155, %s152, 1
      %s157 = smul.addr %s154, 2
      %s158 = sadd.s32 %s156, %s157
      %s159 = smul.addr %s158, 4
      %s160 = scalar_lea.vmem %s1, %s159
      %p161 = pneg %p74
      %p162 = pneg %p71
      %p163 = pneg %p100
      %p164 = pneg %p97
      %p165 = scmp.lt.s32.totalorder %s17, 1
      %s166 = scalar_select %p165, %s17, 1
      %s167 = smul.addr %s166, 8
      %s168 = scalar_lea.vmem %s2, %s167
      %p169 = scmp.lt.s32.totalorder %s17, 1
      %s170 = scalar_select %p169, %s17, 1
      %s171 = smul.addr %s170, 8
      %s172 = scalar_lea.vmem %s0, %s171
      %s173 = smul.u32 2, %s18
      %p174 = scmp.lt.s32.totalorder %s17, 1
      %s175 = scalar_select %p174, %s17, 1
      %p176 = scmp.lt.s32.totalorder %s173, 1
      %s177 = scalar_select %p176, %s173, 1
      %s178 = smul.addr %s175, 2
      %s179 = sadd.s32 %s177, %s178
      %s180 = smul.addr %s179, 4
      %s181 = scalar_lea.vmem %s1, %s180
      %s182 = smul.u32 2, %s18
      %p183 = scmp.lt.s32.totalorder %s17, 1
      %s184 = scalar_select %p183, %s17, 1
      %s185 = smul.addr %s184, 8
      %s186 = scalar_lea.vmem %s2, %s185
      %p187 = scmp.eq.s32.totalorder %s18, 0
      // Predicated region
      $region29: #{rpn_loss_forward.3} parent=27 // pred_check
        %p188 = pneg %p187
      $region30: #{rpn_loss_forward.3} parent=27 // pred_check_branch
        %190 = sbr.rel (%p188) target = $region32
      $region31: #{rpn_loss_forward.3} parent=27 // pred_region
        %vm191 = vcmask 7168
        %192 = vst.msk [vmem:[#allocation2] sm:$0xff] %vm191, -1.0
      $region32: #{rpn_loss_forward.3} parent=27 // pred_fallthru
        _
      %v193 = vld [vmem:[%s172] sm:$0xff]
      %v194 = vld [vmem:[%s181] sm:$0xff]
      %196 = vrot.lane.b32.xlu0 %v193, 2
      %v197 = vpop.permute.xlu0 %196
      %v199 = vsub.f32 %v193, %v197
      %201 = vrot.lane.b32.xlu0 %v199, 127
      %v202 = vpop.permute.xlu0 %201
      %v204 = vmul.f32 %v199, %v202
      %v206 = vrot.slane %v194, 6
      %v208 = vsub.f32 %v194, %v206
      %v210 = vrot.slane %v208, 5
      %v211 = vrot.slane %v210, 4
      %v213 = vmul.f32 %v208, %v211
      %214 = vset.pattern.permute.xlu0 2
      %215 = vperm.xlu0 %214, %v193
      %v216 = vpop.permute.xlu0 %215
      %v218 = vlaneseq
      %v219 = vshrl.u32 %v218, 7
      %v220 = vsub.s32 2, %v219
      %v221 = vrot.slane %v194, %v220
      %v222 = vlaneseq
      %v223 = vshrl.u32 %v222, 7
      %v224 = vsub.s32 6, %v223
      %v225 = vrot.slane %v194, %v224
      %v228 = vlaneseq
      %v229 = vshrl.u32 %v228, 7
      %v230 = vsub.s32 2, %v229
      %v231 = vrot.slane %v221, %v230
      %v232 = vlaneseq
      %v233 = vshrl.u32 %v232, 7
      %v234 = vsub.s32 2, %v233
      %v235 = vrot.slane %v225, %v234
      %v236 = vmin.f32 %v216, %v231
      %v237 = vmin.f32 %v216, %v235
      %238 = vset.pattern.permute.xlu0 0
      %239 = vperm.xlu0 %238, %v193
      %v240 = vpop.permute.xlu0 %239
      %v242 = vlaneseq
      %v243 = vshrl.u32 %v242, 7
      %v244 = vsub.s32 0, %v243
      %v245 = vrot.slane %v194, %v244
      %v246 = vlaneseq
      %v247 = vshrl.u32 %v246, 7
      %v248 = vsub.s32 4, %v247
      %v249 = vrot.slane %v194, %v248
      %v252 = vlaneseq
      %v253 = vshrl.u32 %v252, 7
      %v254 = vsub.s32 0, %v253
      %v255 = vrot.slane %v245, %v254
      %v256 = vlaneseq
      %v257 = vshrl.u32 %v256, 7
      %v258 = vsub.s32 0, %v257
      %v259 = vrot.slane %v249, %v258
      %v260 = vmax.f32 %v240, %v255
      %v261 = vmax.f32 %v240, %v259
      %v262 = vsub.f32 %v236, %v260
      %v263 = vsub.f32 %v237, %v261
      %v264 = vmax.f32 %v262, 0.0
      %v265 = vmax.f32 %v263, 0.0
      %266 = vset.pattern.permute.xlu0 3
      %267 = vperm.xlu0 %266, %v193
      %v268 = vpop.permute.xlu0 %267
      %v270 = vlaneseq
      %v271 = vshrl.u32 %v270, 7
      %v272 = vsub.s32 3, %v271
      %v273 = vrot.slane %v194, %v272
      %v274 = vlaneseq
      %v275 = vshrl.u32 %v274, 7
      %v276 = vsub.s32 7, %v275
      %v277 = vrot.slane %v194, %v276
      %v280 = vlaneseq
      %v281 = vshrl.u32 %v280, 7
      %v282 = vsub.s32 3, %v281
      %v283 = vrot.slane %v273, %v282
      %v284 = vlaneseq
      %v285 = vshrl.u32 %v284, 7
      %v286 = vsub.s32 3, %v285
      %v287 = vrot.slane %v277, %v286
      %v288 = vmin.f32 %v268, %v283
      %v289 = vmin.f32 %v268, %v287
      %290 = vset.pattern.permute.xlu0 1
      %291 = vperm.xlu0 %290, %v193
      %v292 = vpop.permute.xlu0 %291
      %v294 = vlaneseq
      %v295 = vshrl.u32 %v294, 7
      %v296 = vsub.s32 1, %v295
      %v297 = vrot.slane %v194, %v296
      %v298 = vlaneseq
      %v299 = vshrl.u32 %v298, 7
      %v300 = vsub.s32 5, %v299
      %v301 = vrot.slane %v194, %v300
      %v304 = vlaneseq
      %v305 = vshrl.u32 %v304, 7
      %v306 = vsub.s32 1, %v305
      %v307 = vrot.slane %v297, %v306
      %v308 = vlaneseq
      %v309 = vshrl.u32 %v308, 7
      %v310 = vsub.s32 1, %v309
      %v311 = vrot.slane %v301, %v310
      %v312 = vmax.f32 %v292, %v307
      %v313 = vmax.f32 %v292, %v311
      %v314 = vsub.f32 %v288, %v312
      %v315 = vsub.f32 %v289, %v313
      %v316 = vmax.f32 %v314, 0.0
      %v317 = vmax.f32 %v315, 0.0
      %v318 = vmul.f32 %v264, %v316
      %v319 = vmul.f32 %v265, %v317
      %321 = vset.pattern.permute.xlu0 2
      %322 = vperm.xlu0 %321, %v204
      %v323 = vpop.permute.xlu0 %322
      %v326 = vlaneseq
      %v327 = vshrl.u32 %v326, 7
      %v328 = vsub.s32 2, %v327
      %v329 = vrot.slane %v213, %v328
      %v330 = vlaneseq
      %v331 = vshrl.u32 %v330, 7
      %v332 = vsub.s32 6, %v331
      %v333 = vrot.slane %v213, %v332
      %v336 = vlaneseq
      %v337 = vshrl.u32 %v336, 7
      %v338 = vsub.s32 2, %v337
      %v339 = vrot.slane %v329, %v338
      %v340 = vlaneseq
      %v341 = vshrl.u32 %v340, 7
      %v342 = vsub.s32 2, %v341
      %v343 = vrot.slane %v333, %v342
      %v344 = vadd.f32 %v323, %v339
      %v345 = vadd.f32 %v323, %v343
      %v346 = vsub.f32 %v344, %v318
      %v347 = vsub.f32 %v345, %v319
      %vm348 = vcmp.gt.f32.partialorder %v346, 0.0
      %vm349 = vcmp.gt.f32.partialorder %v347, 0.0
      %v350 = vrcp.pop %v346
      %v351 = vmul.f32 %v318, %v350
      %v352 = vrcp.pop %v347
      %v353 = vmul.f32 %v319, %v352
      %v354 = vsel %vm348, %v351, 0.0
      %v355 = vsel %vm349, %v353, 0.0
      %v356 = vld [vmem:[#allocation2] sm:$0xff]
      %v357 = vmax.f32 %v354, %v355
      %358 = vmax.xlane.f32.xlu0 %v357
      %v359 = vpop.xlane.xlu0 %358
      %v360 = vmax.f32 %v356, %v359
      %vm361 = vcmask 7168
      %362 = vst.msk [vmem:[#allocation2] sm:$0xff] %vm361, %v360
      // Predicated region
      $region33: #{rpn_loss_forward.3} parent=27 // pred_check
        %p363 = pneg %p187
      $region34: #{rpn_loss_forward.3} parent=27 // pred_check_branch
        %365 = sbr.rel (%p363) target = $region36
      $region35: #{rpn_loss_forward.3} parent=27 // pred_region
        %v366 = vld [vmem:[#allocation2] sm:$0xff]
        %367 = vst.msk [vmem:[%s186] sm:$0xff] %vm361, %v366
      $region36: #{rpn_loss_forward.3} parent=27 // pred_fallthru
        _
      %p368 = scmp.lt.s32.totalorder %s17, 1
      %s369 = scalar_select %p368, %s17, 1
      %s370 = smul.addr %s369, 8
      %s371 = scalar_lea.vmem %s2, %s370
      // Predicated region
      $region37: #{rpn_loss_forward.3} parent=27 // pred_check
        %p372 = pneg %p97
      $region38: #{rpn_loss_forward.3} parent=27 // pred_check_branch
        %374 = sbr.rel (%p372) target = $region40
      $region39: #{rpn_loss_forward.3} parent=27 // pred_region
        _
      $region40: #{rpn_loss_forward.3} parent=27 // pred_fallthru
        _
    $region28: #{rpn_loss_forward.3} parent=5 // pred_fallthru
      _
    %p375 = scmp.le.s32.totalorder 2, %s8
    // Predicated region
    $region41: #{rpn_loss_forward.3} parent=5 // pred_check
      %p376 = pneg %p375
    $region42: #{rpn_loss_forward.3} parent=5 // pred_check_branch
      %378 = sbr.rel (%p376) target = $region44
    $region43: #{rpn_loss_forward.3} parent=5 // pred_region
      %s379 = ssub.s32 %s8, 2
      // Predicated region
      $region45: #{rpn_loss_forward.3} parent=43 // pred_check
        %p380 = pneg %p103
      $region46: #{rpn_loss_forward.3} parent=43 // pred_check_branch
        %382 = sbr.rel (%p380) target = $region48
      $region47: #{rpn_loss_forward.3} parent=43 // pred_region
        %p383 = scmp.lt.s32.totalorder %s19, 1
        %s384 = scalar_select %p383, %s19, 1
        %s385 = smul.addr %s384, 8
        %s386 = scalar_lea.vmem %s2, %s385
      $region48: #{rpn_loss_forward.3} parent=43 // pred_fallthru
        _
    $region44: #{rpn_loss_forward.3} parent=5 // pred_fallthru
      _
  $region6: #{rpn_loss_forward.3} parent=0 // loop_footer
    %s12 = sadd.s32 1, %s8
  $region7: #{rpn_loss_forward.3} parent=0 // loop_footer_branch
    %7 = sbr.rel target = $region3
  $region8: #{rpn_loss_forward.3} parent=0 // loop_exit
    _

// kernel: rpn_loss_forward.4
$region0: #{rpn_loss_forward.4}
  #allocation0 [shape = 'u32[]', space=smem, size = 0x4, offset = 0x4, fixed_abs, tag = 'smem constant byte address 0x4 - core index']
  #allocation1 [shape = 'u32[144,128]{1,0:T(1,128)}', space=vmem, size = 0x12000, scoped, tag = 'internal scratch']
  %s0 = inlined_call_operand.vmem [shape: f32[2,8,4], index: 0, kind: input, shape index: {}]
  %s1 = inlined_call_operand.vmem [shape: f32[2,4,8], index: 1, kind: input, shape index: {}]
  %s2 = inlined_call_operand.vmem [shape: f32[2,8,1], index: 2, kind: input, shape index: {}]
  %s3 = inlined_call_operand.vmem [shape: f32[2,4,256], index: 3, kind: input, shape index: {}]
  %s4 = inlined_call_operand.vmem [shape: f32[2,5,256], index: 4, kind: output, shape index: {}]
  %s5 = sld [smem:[#allocation0]]
  $region49: #{rpn_loss_forward.4} parent=0
    _
  %s7 = ssub.s32 1, %s5
  %s8 = scalar_select 0, %s7, %s5
  loop: start=0, step=1, limit=4
  $region2: #{rpn_loss_forward.4} parent=0 // loop_pre_header
    _
  $region3: #{rpn_loss_forward.4} parent=0 // loop_header
    %s10 = sphi 0, %s14
    %p11 = scmp.ge.s32.totalorder %s10, 4
    %s17 = sphi 0, %s29
    %s18 = sphi 0, %s25
    %s19 = sphi 0, %s17
    %s20 = sphi 0, %s18
    %s21 = sphi 0, %s19
    %s22 = sphi 0, %s20
    %s32 = sphi 0, %s34
    %s35 = sphi 0, %s32
    %s36 = sphi 0, %s35
    %s52 = sphi 0, %s36
    %s58 = sphi 0, %s60
    %s61 = sphi 0, %s58
    %s62 = sphi 0, %s61
    %s78 = sphi 0, %s62
    %s84 = sphi 0, %s86
    %s87 = sphi 0, %s84
    %s88 = sphi 0, %s87
    %s104 = sphi 0, %s88
    %s112 = sphi 0, %s114
    %s115 = sphi 0, %s112
    %s116 = sphi 0, %s115
    %s132 = sphi 0, %s116
    %s140 = sphi 0, %s142
    %s143 = sphi 0, %s140
    %s144 = sphi 0, %s143
    %s160 = sphi 0, %s144
  $region4: #{rpn_loss_forward.4} parent=0 // loop_header_branch
    %13 = sbr.rel (%p11) target = $region8
  $region5: #{rpn_loss_forward.4} parent=0 // loop_body
    %s15 = ssub.s32 %s10, 1
    %s16 = ssub.s32 %s10, 2
    %s23 = sadd.s32 1, %s18
    %p24 = scmp.ge.s32.totalorder %s23, 1
    %s25 = scalar_select %p24, 0, %s23
    %s26 = sadd.s32 1, %s17
    %s27 = scalar_select %p24, %s26, %s17
    %p28 = scmp.ge.s32.totalorder %s27, 2
    %s29 = scalar_select %p28, 0, %s27
    %s30 = ssub.s32 %s17, %s29
    %p31 = scmp.eq.s32.totalorder %s30, 0
    %s33 = sadd.s32 %s32, 1
    %s34 = scalar_select %p31, %s32, %s33
    %p37 = pneg %p31
    %p38 = scmp.eq.s32.totalorder %s10, 1
    %p39 = por %p37, %p38
    %p40 = scmp.ne.s32.totalorder %s32, %s35
    %p41 = scmp.eq.s32.totalorder %s10, 0
    %p42 = por %p40, %p41
    %p43 = scmp.ne.s32.totalorder %s32, %s35
    %p44 = scmp.eq.s32.totalorder %s15, 1
    %p45 = por %p43, %p44
    %p46 = scmp.ne.s32.totalorder %s35, %s36
    %p47 = scmp.eq.s32.totalorder %s15, 0
    %p48 = por %p46, %p47
    %p49 = scmp.ne.s32.totalorder %s35, %s36
    %p50 = scmp.eq.s32.totalorder %s16, 1
    %p51 = por %p49, %p50
    %p53 = scmp.ne.s32.totalorder %s36, %s52
    %p54 = scmp.eq.s32.totalorder %s16, 0
    %p55 = por %p53, %p54
    %s56 = ssub.s32 %s17, %s29
    %p57 = scmp.eq.s32.totalorder %s56, 0
    %s59 = sadd.s32 %s58, 1
    %s60 = scalar_select %p57, %s58, %s59
    %p63 = pneg %p57
    %p64 = scmp.eq.s32.totalorder %s10, 1
    %p65 = por %p63, %p64
    %p66 = scmp.ne.s32.totalorder %s58, %s61
    %p67 = scmp.eq.s32.totalorder %s10, 0
    %p68 = por %p66, %p67
    %p69 = scmp.ne.s32.totalorder %s58, %s61
    %p70 = scmp.eq.s32.totalorder %s15, 1
    %p71 = por %p69, %p70
    %p72 = scmp.ne.s32.totalorder %s61, %s62
    %p73 = scmp.eq.s32.totalorder %s15, 0
    %p74 = por %p72, %p73
    %p75 = scmp.ne.s32.totalorder %s61, %s62
    %p76 = scmp.eq.s32.totalorder %s16, 1
    %p77 = por %p75, %p76
    %p79 = scmp.ne.s32.totalorder %s62, %s78
    %p80 = scmp.eq.s32.totalorder %s16, 0
    %p81 = por %p79, %p80
    %s82 = ssub.s32 %s17, %s29
    %p83 = scmp.eq.s32.totalorder %s82, 0
    %s85 = sadd.s32 %s84, 1
    %s86 = scalar_select %p83, %s84, %s85
    %p89 = pneg %p83
    %p90 = scmp.eq.s32.totalorder %s10, 1
    %p91 = por %p89, %p90
    %p92 = scmp.ne.s32.totalorder %s84, %s87
    %p93 = scmp.eq.s32.totalorder %s10, 0
    %p94 = por %p92, %p93
    %p95 = scmp.ne.s32.totalorder %s84, %s87
    %p96 = scmp.eq.s32.totalorder %s15, 1
    %p97 = por %p95, %p96
    %p98 = scmp.ne.s32.totalorder %s87, %s88
    %p99 = scmp.eq.s32.totalorder %s15, 0
    %p100 = por %p98, %p99
    %p101 = scmp.ne.s32.totalorder %s87, %s88
    %p102 = scmp.eq.s32.totalorder %s16, 1
    %p103 = por %p101, %p102
    %p105 = scmp.ne.s32.totalorder %s88, %s104
    %p106 = scmp.eq.s32.totalorder %s16, 0
    %p107 = por %p105, %p106
    %s108 = ssub.s32 %s17, %s29
    %s109 = ssub.s32 %s18, %s25
    %s110 = sor.u32 %s108, %s109
    %p111 = scmp.eq.s32.totalorder %s110, 0
    %s113 = sadd.s32 %s112, 1
    %s114 = scalar_select %p111, %s112, %s113
    %p117 = pneg %p111
    %p118 = scmp.eq.s32.totalorder %s10, 1
    %p119 = por %p117, %p118
    %p120 = scmp.ne.s32.totalorder %s112, %s115
    %p121 = scmp.eq.s32.totalorder %s10, 0
    %p122 = por %p120, %p121
    %p123 = scmp.ne.s32.totalorder %s112, %s115
    %p124 = scmp.eq.s32.totalorder %s15, 1
    %p125 = por %p123, %p124
    %p126 = scmp.ne.s32.totalorder %s115, %s116
    %p127 = scmp.eq.s32.totalorder %s15, 0
    %p128 = por %p126, %p127
    %p129 = scmp.ne.s32.totalorder %s115, %s116
    %p130 = scmp.eq.s32.totalorder %s16, 1
    %p131 = por %p129, %p130
    %p133 = scmp.ne.s32.totalorder %s116, %s132
    %p134 = scmp.eq.s32.totalorder %s16, 0
    %p135 = por %p133, %p134
    %s136 = ssub.s32 %s17, %s29
    %s137 = ssub.s32 %s18, %s25
    %s138 = sor.u32 %s136, %s137
    %p139 = scmp.eq.s32.totalorder %s138, 0
    %s141 = sadd.s32 %s140, 1
    %s142 = scalar_select %p139, %s140, %s141
    %p145 = pneg %p139
    %p146 = scmp.eq.s32.totalorder %s10, 1
    %p147 = por %p145, %p146
    %p148 = scmp.ne.s32.totalorder %s140, %s143
    %p149 = scmp.eq.s32.totalorder %s10, 0
    %p150 = por %p148, %p149
    %p151 = scmp.ne.s32.totalorder %s140, %s143
    %p152 = scmp.eq.s32.totalorder %s15, 1
    %p153 = por %p151, %p152
    %p154 = scmp.ne.s32.totalorder %s143, %s144
    %p155 = scmp.eq.s32.totalorder %s15, 0
    %p156 = por %p154, %p155
    %p157 = scmp.ne.s32.totalorder %s143, %s144
    %p158 = scmp.eq.s32.totalorder %s16, 1
    %p159 = por %p157, %p158
    %p161 = scmp.ne.s32.totalorder %s144, %s160
    %p162 = scmp.eq.s32.totalorder %s16, 0
    %p163 = por %p161, %p162
    %p164 = scmp.le.s32.totalorder 1, %s10
    %p165 = scmp.lt.s32.totalorder %s10, 3
    %p166 = pnand %p164, %p165
    %p167 = pneg %p166
    // Predicated region
    $region9: #{rpn_loss_forward.4} parent=5 // pred_check
      _
    $region10: #{rpn_loss_forward.4} parent=5 // pred_check_branch
      %169 = sbr.rel (%p166) target = $region12
    $region11: #{rpn_loss_forward.4} parent=5 // pred_region
      %s170 = ssub.s32 %s10, 1
    $region12: #{rpn_loss_forward.4} parent=5 // pred_fallthru
      _
    %p171 = scmp.lt.s32.totalorder %s10, 2
    // Predicated region
    $region13: #{rpn_loss_forward.4} parent=5 // pred_check
      %p172 = pneg %p171
    $region14: #{rpn_loss_forward.4} parent=5 // pred_check_branch
      %174 = sbr.rel (%p172) target = $region16
    $region15: #{rpn_loss_forward.4} parent=5 // pred_region
      // Predicated region
      $region17: #{rpn_loss_forward.4} parent=15 // pred_check
        %p175 = pneg %p42
      $region18: #{rpn_loss_forward.4} parent=15 // pred_check_branch
        %177 = sbr.rel (%p175) target = $region20
      $region19: #{rpn_loss_forward.4} parent=15 // pred_region
        %p178 = scmp.lt.s32.totalorder %s17, 1
        %s179 = scalar_select %p178, %s17, 1
        %s180 = smul.addr %s179, 8
        %s181 = scalar_lea.vmem %s0, %s180
      $region20: #{rpn_loss_forward.4} parent=15 // pred_fallthru
        _
      // Predicated region
      $region21: #{rpn_loss_forward.4} parent=15 // pred_check
        %p182 = pneg %p68
      $region22: #{rpn_loss_forward.4} parent=15 // pred_check_branch
        %184 = sbr.rel (%p182) target = $region24
      $region23: #{rpn_loss_forward.4} parent=15 // pred_region
        %p185 = scmp.lt.s32.totalorder %s17, 1
        %s186 = scalar_select %p185, %s17, 1
        %s187 = smul.addr %s186, 4
        %s188 = scalar_lea.vmem %s1, %s187
      $region24: #{rpn_loss_forward.4} parent=15 // pred_fallthru
        _
      // Predicated region
      $region25: #{rpn_loss_forward.4} parent=15 // pred_check
        %p189 = pneg %p94
      $region26: #{rpn_loss_forward.4} parent=15 // pred_check_branch
        %191 = sbr.rel (%p189) target = $region28
      $region27: #{rpn_loss_forward.4} parent=15 // pred_region
        %p192 = scmp.lt.s32.totalorder %s17, 1
        %s193 = scalar_select %p192, %s17, 1
        %s194 = smul.addr %s193, 8
        %s195 = scalar_lea.vmem %s2, %s194
      $region28: #{rpn_loss_forward.4} parent=15 // pred_fallthru
        _
      // Predicated region
      $region29: #{rpn_loss_forward.4} parent=15 // pred_check
        %p196 = pneg %p122
      $region30: #{rpn_loss_forward.4} parent=15 // pred_check_branch
        %198 = sbr.rel (%p196) target = $region32
      $region31: #{rpn_loss_forward.4} parent=15 // pred_region
        %s199 = smul.u32 2, %s18
        %p200 = scmp.lt.s32.totalorder %s17, 1
        %s201 = scalar_select %p200, %s17, 1
        %p202 = scmp.lt.s32.totalorder %s199, 1
        %s203 = scalar_select %p202, %s199, 1
        %s204 = smul.addr %s201, 2
        %s205 = sadd.s32 %s203, %s204
        %s206 = smul.addr %s205, 4
        %s207 = scalar_lea.vmem %s3, %s206
        %s208 = smul.u32 2, %s18
      $region32: #{rpn_loss_forward.4} parent=15 // pred_fallthru
        _
    $region16: #{rpn_loss_forward.4} parent=5 // pred_fallthru
      _
    %p209 = scmp.le.s32.totalorder 1, %s10
    %p210 = scmp.lt.s32.totalorder %s10, 3
    %p211 = pnand %p209, %p210
    %p212 = pneg %p211
    // Predicated region
    $region33: #{rpn_loss_forward.4} parent=5 // pred_check
      _
    $region34: #{rpn_loss_forward.4} parent=5 // pred_check_branch
      %214 = sbr.rel (%p211) target = $region36
    $region35: #{rpn_loss_forward.4} parent=5 // pred_region
      %s215 = ssub.s32 %s10, 1
      %p216 = scmp.lt.s32.totalorder %s19, 1
      %s217 = scalar_select %p216, %s19, 1
      %s218 = smul.addr %s217, 8
      %s219 = scalar_lea.vmem %s0, %s218
      %p220 = pneg %p48
      %p221 = pneg %p45
      %p222 = scmp.lt.s32.totalorder %s19, 1
      %s223 = scalar_select %p222, %s19, 1
      %s224 = smul.addr %s223, 4
      %s225 = scalar_lea.vmem %s1, %s224
      %p226 = pneg %p74
      %p227 = pneg %p71
      %p228 = scmp.lt.s32.totalorder %s19, 1
      %s229 = scalar_select %p228, %s19, 1
      %s230 = smul.addr %s229, 8
      %s231 = scalar_lea.vmem %s2, %s230
      %p232 = pneg %p100
      %p233 = pneg %p97
      %s234 = smul.u32 2, %s20
      %p235 = scmp.lt.s32.totalorder %s19, 1
      %s236 = scalar_select %p235, %s19, 1
      %p237 = scmp.lt.s32.totalorder %s234, 1
      %s238 = scalar_select %p237, %s234, 1
      %s239 = smul.addr %s236, 2
      %s240 = sadd.s32 %s238, %s239
      %s241 = smul.addr %s240, 4
      %s242 = scalar_lea.vmem %s3, %s241
      %p243 = pneg %p128
      %p244 = pneg %p125
      %p245 = pneg %p156
      %p246 = pneg %p153
      %s247 = smul.u32 2, %s20
      %p248 = scmp.lt.s32.totalorder %s19, 1
      %s249 = scalar_select %p248, %s19, 1
      %p250 = scmp.lt.s32.totalorder %s247, 1
      %s251 = scalar_select %p250, %s247, 1
      %s252 = smul.addr %s249, 2
      %s253 = sadd.s32 %s251, %s252
      %s254 = smul.addr %s253, 8
      %s255 = scalar_lea.vmem %s4, %s254
      %p256 = scmp.lt.s32.totalorder %s19, 1
      %s257 = scalar_select %p256, %s19, 1
      %s258 = smul.addr %s257, 8
      %s259 = scalar_lea.vmem %s0, %s258
      %p260 = scmp.lt.s32.totalorder %s19, 1
      %s261 = scalar_select %p260, %s19, 1
      %s262 = smul.addr %s261, 4
      %s263 = scalar_lea.vmem %s1, %s262
      %p264 = scmp.lt.s32.totalorder %s19, 1
      %s265 = scalar_select %p264, %s19, 1
      %s266 = smul.addr %s265, 8
      %s267 = scalar_lea.vmem %s2, %s266
      %s268 = smul.u32 2, %s20
      %p269 = scmp.lt.s32.totalorder %s19, 1
      %s270 = scalar_select %p269, %s19, 1
      %p271 = scmp.lt.s32.totalorder %s268, 1
      %s272 = scalar_select %p271, %s268, 1
      %s273 = smul.addr %s270, 2
      %s274 = sadd.s32 %s272, %s273
      %s275 = smul.addr %s274, 4
      %s276 = scalar_lea.vmem %s3, %s275
      %s277 = smul.u32 2, %s20
      %s278 = smul.u32 2, %s20
      %p279 = scmp.lt.s32.totalorder %s19, 1
      %s280 = scalar_select %p279, %s19, 1
      %p281 = scmp.lt.s32.totalorder %s278, 1
      %s282 = scalar_select %p281, %s278, 1
      %s283 = smul.addr %s280, 2
      %s284 = sadd.s32 %s282, %s283
      %s285 = smul.addr %s284, 8
      %s286 = scalar_lea.vmem %s4, %s285
      %s287 = smul.u32 2, %s20
      %v288 = vld [vmem:[%s259] sm:$0xff]
      %v289 = vld [vmem:[%s276] sm:$0xff]
      %291 = vrot.lane.b32.xlu0 %v288, 2
      %v292 = vpop.permute.xlu0 %291
      %v294 = vsub.f32 %v288, %v292
      %296 = vrot.lane.b32.xlu0 %v294, 127
      %v297 = vpop.permute.xlu0 %296
      %v299 = vmul.f32 %v294, %v297
      %v301 = vrot.slane %v289, 6
      %v303 = vsub.f32 %v289, %v301
      %v305 = vrot.slane %v303, 5
      %v306 = vrot.slane %v305, 4
      %v308 = vmul.f32 %v303, %v306
      %309 = vset.pattern.permute.xlu0 2
      %310 = vperm.xlu0 %309, %v288
      %v311 = vpop.permute.xlu0 %310
      %v313 = vlaneseq
      %v314 = vshrl.u32 %v313, 7
      %v315 = vsub.s32 2, %v314
      %v316 = vrot.slane %v289, %v315
      %v317 = vlaneseq
      %v318 = vshrl.u32 %v317, 7
      %v319 = vsub.s32 6, %v318
      %v320 = vrot.slane %v289, %v319
      %v323 = vlaneseq
      %v324 = vshrl.u32 %v323, 7
      %v325 = vsub.s32 2, %v324
      %v326 = vrot.slane %v316, %v325
      %v327 = vlaneseq
      %v328 = vshrl.u32 %v327, 7
      %v329 = vsub.s32 2, %v328
      %v330 = vrot.slane %v320, %v329
      %v331 = vmin.f32 %v311, %v326
      %v332 = vmin.f32 %v311, %v330
      %333 = vset.pattern.permute.xlu0 0
      %334 = vperm.xlu0 %333, %v288
      %v335 = vpop.permute.xlu0 %334
      %v337 = vlaneseq
      %v338 = vshrl.u32 %v337, 7
      %v339 = vsub.s32 0, %v338
      %v340 = vrot.slane %v289, %v339
      %v341 = vlaneseq
      %v342 = vshrl.u32 %v341, 7
      %v343 = vsub.s32 4, %v342
      %v344 = vrot.slane %v289, %v343
      %v347 = vlaneseq
      %v348 = vshrl.u32 %v347, 7
      %v349 = vsub.s32 0, %v348
      %v350 = vrot.slane %v340, %v349
      %v351 = vlaneseq
      %v352 = vshrl.u32 %v351, 7
      %v353 = vsub.s32 0, %v352
      %v354 = vrot.slane %v344, %v353
      %v355 = vmax.f32 %v335, %v350
      %v356 = vmax.f32 %v335, %v354
      %v357 = vsub.f32 %v331, %v355
      %v358 = vsub.f32 %v332, %v356
      %v359 = vmax.f32 %v357, 0.0
      %v360 = vmax.f32 %v358, 0.0
      %361 = vset.pattern.permute.xlu0 3
      %362 = vperm.xlu0 %361, %v288
      %v363 = vpop.permute.xlu0 %362
      %v365 = vlaneseq
      %v366 = vshrl.u32 %v365, 7
      %v367 = vsub.s32 3, %v366
      %v368 = vrot.slane %v289, %v367
      %v369 = vlaneseq
      %v370 = vshrl.u32 %v369, 7
      %v371 = vsub.s32 7, %v370
      %v372 = vrot.slane %v289, %v371
      %v375 = vlaneseq
      %v376 = vshrl.u32 %v375, 7
      %v377 = vsub.s32 3, %v376
      %v378 = vrot.slane %v368, %v377
      %v379 = vlaneseq
      %v380 = vshrl.u32 %v379, 7
      %v381 = vsub.s32 3, %v380
      %v382 = vrot.slane %v372, %v381
      %v383 = vmin.f32 %v363, %v378
      %v384 = vmin.f32 %v363, %v382
      %385 = vset.pattern.permute.xlu0 1
      %386 = vperm.xlu0 %385, %v288
      %v387 = vpop.permute.xlu0 %386
      %v389 = vlaneseq
      %v390 = vshrl.u32 %v389, 7
      %v391 = vsub.s32 1, %v390
      %v392 = vrot.slane %v289, %v391
      %v393 = vlaneseq
      %v394 = vshrl.u32 %v393, 7
      %v395 = vsub.s32 5, %v394
      %v396 = vrot.slane %v289, %v395
      %v399 = vlaneseq
      %v400 = vshrl.u32 %v399, 7
      %v401 = vsub.s32 1, %v400
      %v402 = vrot.slane %v392, %v401
      %v403 = vlaneseq
      %v404 = vshrl.u32 %v403, 7
      %v405 = vsub.s32 1, %v404
      %v406 = vrot.slane %v396, %v405
      %v407 = vmax.f32 %v387, %v402
      %v408 = vmax.f32 %v387, %v406
      %v409 = vsub.f32 %v383, %v407
      %v410 = vsub.f32 %v384, %v408
      %v411 = vmax.f32 %v409, 0.0
      %v412 = vmax.f32 %v410, 0.0
      %v413 = vmul.f32 %v359, %v411
      %v414 = vmul.f32 %v360, %v412
      %416 = vset.pattern.permute.xlu0 2
      %417 = vperm.xlu0 %416, %v299
      %v418 = vpop.permute.xlu0 %417
      %v421 = vlaneseq
      %v422 = vshrl.u32 %v421, 7
      %v423 = vsub.s32 2, %v422
      %v424 = vrot.slane %v308, %v423
      %v425 = vlaneseq
      %v426 = vshrl.u32 %v425, 7
      %v427 = vsub.s32 6, %v426
      %v428 = vrot.slane %v308, %v427
      %v431 = vlaneseq
      %v432 = vshrl.u32 %v431, 7
      %v433 = vsub.s32 2, %v432
      %v434 = vrot.slane %v424, %v433
      %v435 = vlaneseq
      %v436 = vshrl.u32 %v435, 7
      %v437 = vsub.s32 2, %v436
      %v438 = vrot.slane %v428, %v437
      %v439 = vadd.f32 %v418, %v434
      %v440 = vadd.f32 %v418, %v438
      %v441 = vsub.f32 %v439, %v413
      %v442 = vsub.f32 %v440, %v414
      %vm443 = vcmp.gt.f32.partialorder %v441, 0.0
      %vm444 = vcmp.gt.f32.partialorder %v442, 0.0
      %v445 = vrcp.pop %v441
      %v446 = vmul.f32 %v413, %v445
      %v447 = vrcp.pop %v442
      %v448 = vmul.f32 %v414, %v447
      %v449 = vsel %vm443, %v446, 0.0
      %v450 = vsel %vm444, %v448, 0.0
      %v451 = vrot.slane %v449, 4
      %v452 = vmax.f32 %v449, %v451
      %v453 = vrot.slane %v452, 2
      %v454 = vmax.f32 %v452, %v453
      %v455 = vrot.slane %v454, 1
      %v456 = vmax.f32 %v454, %v455
      %v457 = vrot.slane %v450, 4
      %v458 = vmax.f32 %v450, %v457
      %v459 = vrot.slane %v458, 2
      %v460 = vmax.f32 %v458, %v459
      %v461 = vrot.slane %v460, 1
      %v462 = vmax.f32 %v460, %v461
      %v463 = vlaneseq
      %v464 = vshrl.u32 %v463, 7
      %vm465 = vcmp.ge.f32.partialorder %v449, %v456
      %vm466 = vcmp.ge.f32.partialorder %v450, %v462
      %v467 = vsel %vm465, %v464, 8
      %v468 = vsel %vm466, %v464, 8
      %v469 = vrot.slane %v467, 4
      %vm470 = vcmp.lt.s32.totalorder %v467, %v469
      %v471 = vsel %vm470, %v467, %v469
      %v472 = vrot.slane %v471, 2
      %vm473 = vcmp.lt.s32.totalorder %v471, %v472
      %v474 = vsel %vm473, %v471, %v472
      %v475 = vrot.slane %v474, 1
      %vm476 = vcmp.lt.s32.totalorder %v474, %v475
      %v477 = vsel %vm476, %v474, %v475
      %v478 = vrot.slane %v468, 4
      %vm479 = vcmp.lt.s32.totalorder %v468, %v478
      %v480 = vsel %vm479, %v468, %v478
      %v481 = vrot.slane %v480, 2
      %vm482 = vcmp.lt.s32.totalorder %v480, %v481
      %v483 = vsel %vm482, %v480, %v481
      %v484 = vrot.slane %v483, 1
      %vm485 = vcmp.lt.s32.totalorder %v483, %v484
      %v486 = vsel %vm485, %v483, %v484
      %vm487 = vcmp.lt.f32.partialorder %v456, 0.3
      %vm488 = vcmp.lt.f32.partialorder %v462, 0.3
      %vm489 = vcmp.ge.f32.partialorder %v456, 0.3
      %vm490 = vcmp.ge.f32.partialorder %v462, 0.3
      %vm491 = vcmp.lt.f32.partialorder %v456, 0.7
      %vm492 = vcmp.lt.f32.partialorder %v462, 0.7
      %vm493 = vmand %vm489, %vm491
      %vm494 = vmand %vm490, %vm492
      %v495 = vsel %vm493, 4294967294, %v477
      %v496 = vsel %vm494, 4294967294, %v486
      %v497 = vsel %vm487, 4294967295, %v495
      %v498 = vsel %vm488, 4294967295, %v496
      %v499 = vld [vmem:[%s267] sm:$0xff]
      %501 = vset.pattern.permute.xlu0 0
      %502 = vperm.xlu0 %501, %v499
      %v503 = vpop.permute.xlu0 %502
      %vm505 = vcmp.eq.f32.partialorder %v449, %v503
      %vm506 = vcmp.eq.f32.partialorder %v450, %v503
      %v507 = vsel %vm505, 1, 0
      %v508 = vsel %vm506, 1, 0
      %v509 = vrot.slane %v507, 4
      %vm510 = vcmp.gt.s32.totalorder %v507, %v509
      %v511 = vsel %vm510, %v507, %v509
      %v512 = vrot.slane %v511, 2
      %vm513 = vcmp.gt.s32.totalorder %v511, %v512
      %v514 = vsel %vm513, %v511, %v512
      %v515 = vrot.slane %v514, 1
      %vm516 = vcmp.gt.s32.totalorder %v514, %v515
      %v517 = vsel %vm516, %v514, %v515
      %v518 = vrot.slane %v508, 4
      %vm519 = vcmp.gt.s32.totalorder %v508, %v518
      %v520 = vsel %vm519, %v508, %v518
      %v521 = vrot.slane %v520, 2
      %vm522 = vcmp.gt.s32.totalorder %v520, %v521
      %v523 = vsel %vm522, %v520, %v521
      %v524 = vrot.slane %v523, 1
      %vm525 = vcmp.gt.s32.totalorder %v523, %v524
      %v526 = vsel %vm525, %v523, %v524
      %vm527 = vcmp.gt.s32.totalorder %v517, 0
      %vm528 = vcmp.gt.s32.totalorder %v526, 0
      %v529 = vsel %vm527, %v477, %v497
      %v530 = vsel %vm528, %v486, %v498
      %vm531 = vcmp.ge.s32.totalorder %v529, 0
      %vm532 = vcmp.ge.s32.totalorder %v530, 0
      %v533 = vsel %vm531, 1, 0
      %v534 = vsel %vm532, 1, 0
      %v535 = vcvt.s32.f32 %v533
      %v536 = vcvt.s32.f32 %v534
      %vm537 = vcmp.eq.s32.totalorder %v529, 4294967294
      %vm538 = vcmp.eq.s32.totalorder %v530, 4294967294
      %v539 = vsel %vm537, -1.0, %v535
      %v540 = vsel %vm538, -1.0, %v536
      %vm541 = vcmp.gt.s32.totalorder %v529, 0
      %v542 = vsel %vm541, %v529, 0
      %vm543 = vcmp.gt.s32.totalorder %v530, 0
      %v544 = vsel %vm543, %v530, 0
      %vm545 = vcmp.eq.s32.totalorder %v464, %v542
      %vm546 = vcmp.eq.s32.totalorder %v464, %v544
      %v547 = vsel %vm545, 1, 0
      %v548 = vsel %vm546, 1, 0
      %v549 = vcvt.s32.f32 %v547
      %v550 = vcvt.s32.f32 %v548
      %v551 = vld [vmem:[%s263] sm:$0xf]
      %vm552 = vcmask 64512
      %v554 = vsel %vm552, %v551, 0
      %556 = vmatprep.subr.mxu0 0.0
      %557 = vmatpush1.msra.mxu0 0.0
      %558 = vmatprep.subr.mxu0 0.0
      %559 = vmatpush1.msra.mxu0 0.0
      %560 = vmatprep.subr.mxu0 0.0
      %561 = vmatpush1.msra.mxu0 0.0
      %562 = vmatprep.subr.mxu0 0.0
      %563 = vmatpush1.msra.mxu0 0.0
      %564 = vmatprep.subr.mxu0 0.0
      %565 = vmatpush1.msra.mxu0 0.0
      %566 = vmatprep.subr.mxu0 0.0
      %567 = vmatpush1.msra.mxu0 0.0
      %568 = vmatprep.subr.mxu0 0.0
      %569 = vmatpush1.msra.mxu0 0.0
      %570 = vmatprep.subr.mxu0 0.0
      %571 = vmatpush1.msra.mxu0 0.0
      %572 = vmatprep.subr.mxu0 0.0
      %573 = vmatpush1.msra.mxu0 0.0
      %574 = vmatprep.subr.mxu0 0.0
      %575 = vmatpush1.msra.mxu0 0.0
      %576 = vmatprep.subr.mxu0 0.0
      %577 = vmatpush1.msra.mxu0 0.0
      %578 = vmatprep.subr.mxu0 0.0
      %579 = vmatpush1.msra.mxu0 0.0
      %580 = vmatprep.subr.mxu0 0.0
      %581 = vmatpush1.msra.mxu0 0.0
      %582 = vmatprep.subr.mxu0 0.0
      %583 = vmatpush1.msra.mxu0 0.0
      %584 = vmatprep.subr.mxu0 0.0
      %585 = vmatpush1.msra.mxu0 0.0
      %586 = vmatprep.subr.mxu0 %v550
      %587 = vmatpush1.msra.mxu0 %v549
      %588 = vmatprep.subr.mxu0 0.0
      %589 = vmatpush2.msra.mxu0 0.0
      %590 = vmatprep.subr.mxu0 0.0
      %591 = vmatpush2.msra.mxu0 0.0
      %592 = vmatprep.subr.mxu0 0.0
      %593 = vmatpush2.msra.mxu0 0.0
      %594 = vmatprep.subr.mxu0 0.0
      %595 = vmatpush2.msra.mxu0 0.0
      %596 = vmatprep.subr.mxu0 0.0
      %597 = vmatpush2.msra.mxu0 0.0
      %598 = vmatprep.subr.mxu0 0.0
      %599 = vmatpush2.msra.mxu0 0.0
      %600 = vmatprep.subr.mxu0 0.0
      %601 = vmatpush2.msra.mxu0 0.0
      %602 = vmatprep.subr.mxu0 0.0
      %603 = vmatpush2.msra.mxu0 0.0
      %604 = vmatprep.subr.mxu0 0.0
      %605 = vmatpush2.msra.mxu0 0.0
      %606 = vmatprep.subr.mxu0 0.0
      %607 = vmatpush2.msra.mxu0 0.0
      %608 = vmatprep.subr.mxu0 0.0
      %609 = vmatpush2.msra.mxu0 0.0
      %610 = vmatprep.subr.mxu0 0.0
      %611 = vmatpush2.msra.mxu0 0.0
      %612 = vmatprep.subr.mxu0 0.0
      %613 = vmatpush2.msra.mxu0 0.0
      %614 = vmatprep.subr.mxu0 0.0
      %615 = vmatpush2.msra.mxu0 0.0
      %616 = vmatprep.subr.mxu0 0.0
      %617 = vmatpush2.msra.mxu0 0.0
      %618 = vmatprep.subr.mxu0 0.0
      %619 = vmatpush2.msra.mxu0 0.0
      %620 = vmatprep.mubr.f32.mxu0 0.0
      %621 = vmatmul.mubr.f32.gmra.mxu0 %v554
      %v622 = vpop.f32.mrf.mxu0
      %v623 = vadd.f32 0.0, %v622
      %v624 = vpop.f32.mrf.mxu0
      %v625 = vadd.f32 0.0, %v624
      %626 = vdwg.mxu0
      %v627 = vmul.f32 %v303, 0.5
      %v629 = vrot.slane %v627, 6
      %v630 = vrot.slane %v629, 4
      %v632 = vadd.f32 %v289, %v630
      %v635 = vrot.slane %v623, 6
      %v636 = vrot.slane %v625, 6
      %v639 = vsub.f32 %v623, %v635
      %v640 = vsub.f32 %v625, %v636
      %v641 = vmul.f32 %v639, 0.5
      %v642 = vmul.f32 %v640, 0.5
      %v645 = vrot.slane %v641, 2
      %v646 = vrot.slane %v642, 2
      %v649 = vadd.f32 %v623, %v645
      %v650 = vadd.f32 %v625, %v646
      %v653 = vcombine.low %v539, %v540
      %v655 = vunpack.c.l.s4 1966171168
      %v656 = vunpack.c.0.s8 %v655
      %v657 = vlaneseq
      %v658 = vshrl.u32 %v657, 7
      %v659 = vsub.s32 %v656, %v658
      %v660 = vrot.slane %v653, %v659
      %v662 = vunpack.c.l.s4 1966171168
      %v663 = vunpack.c.0.s8 %v662
      %v664 = vlaneseq
      %v665 = vshrl.u32 %v664, 7
      %v666 = vsub.s32 %v663, %v665
      %v667 = vrot.slane %v660, %v666
      %v669 = vlaneseq
      %vm670 = vcmp.ge.s32.totalorder %v669, 0
      %vm671 = vcmp.lt.s32.totalorder %v669, 256
      %vm672 = vmand %vm670, %vm671
      %673 = vst.msk [vmem:[%s286] ss:$8 sm:$0x3] %vm672, %v667
      %674 = vst.msk [vmem:[%s286] ss:$8 sm:$0x0] %vm672, %v667
      %v676 = vlaneseq
      %v677 = vshrl.u32 %v676, 7
      %v678 = vsub.s32 0, %v677
      %v679 = vrot.slane %v632, %v678
      %v680 = vlaneseq
      %v681 = vshrl.u32 %v680, 7
      %v682 = vsub.s32 4, %v681
      %v683 = vrot.slane %v632, %v682
      %v686 = vsub.f32 %v649, %v679
      %v687 = vsub.f32 %v650, %v683
      %v688 = vlaneseq
      %v689 = vshrl.u32 %v688, 7
      %v690 = vsub.s32 2, %v689
      %v691 = vrot.slane %v303, %v690
      %v692 = vlaneseq
      %v693 = vshrl.u32 %v692, 7
      %v694 = vsub.s32 6, %v693
      %v695 = vrot.slane %v303, %v694
      %v698 = vrcp.pop %v691
      %v699 = vmul.f32 %v686, %v698
      %v700 = vrcp.pop %v695
      %v701 = vmul.f32 %v687, %v700
      %v704 = vcombine.low %v699, %v701
      %v706 = vunpack.c.l.s4 1966171168
      %v707 = vunpack.c.0.s8 %v706
      %v708 = vlaneseq
      %v709 = vshrl.u32 %v708, 7
      %v710 = vsub.s32 %v707, %v709
      %v711 = vrot.slane %v704, %v710
      %v713 = vunpack.c.l.s4 1966171168
      %v714 = vunpack.c.0.s8 %v713
      %v715 = vlaneseq
      %v716 = vshrl.u32 %v715, 7
      %v717 = vsub.s32 %v714, %v716
      %v718 = vrot.slane %v711, %v717
      %s720 = scalar_lea.vmem %s286, 1
      %721 = vst.msk [vmem:[%s720] ss:$8 sm:$0x3] %vm672, %v718
      %722 = vst.msk [vmem:[%s720] ss:$8 sm:$0x0] %vm672, %v718
      %v723 = vlaneseq
      %v724 = vshrl.u32 %v723, 7
      %v725 = vsub.s32 1, %v724
      %v726 = vrot.slane %v632, %v725
      %v727 = vlaneseq
      %v728 = vshrl.u32 %v727, 7
      %v729 = vsub.s32 5, %v728
      %v730 = vrot.slane %v632, %v729
      %v733 = vsub.f32 %v649, %v726
      %v734 = vsub.f32 %v650, %v730
      %v735 = vlaneseq
      %v736 = vshrl.u32 %v735, 7
      %v737 = vsub.s32 3, %v736
      %v738 = vrot.slane %v303, %v737
      %v739 = vlaneseq
      %v740 = vshrl.u32 %v739, 7
      %v741 = vsub.s32 7, %v740
      %v742 = vrot.slane %v303, %v741
      %v745 = vrcp.pop %v738
      %v746 = vmul.f32 %v733, %v745
      %v747 = vrcp.pop %v742
      %v748 = vmul.f32 %v734, %v747
      %v751 = vcombine.low %v746, %v748
      %v753 = vunpack.c.l.s4 1966171168
      %v754 = vunpack.c.0.s8 %v753
      %v755 = vlaneseq
      %v756 = vshrl.u32 %v755, 7
      %v757 = vsub.s32 %v754, %v756
      %v758 = vrot.slane %v751, %v757
      %v759 = vcombine.high %v758, %v758
      %v761 = vunpack.c.l.s4 1966171168
      %v762 = vunpack.c.0.s8 %v761
      %v763 = vlaneseq
      %v764 = vshrl.u32 %v763, 7
      %v765 = vsub.s32 %v762, %v764
      %v766 = vrot.slane %v759, %v765
      %s768 = scalar_lea.vmem %s286, 2
      %769 = vst.msk [vmem:[%s768] ss:$8 sm:$0x3] %vm672, %v766
      %770 = vst.msk [vmem:[%s768] ss:$8 sm:$0x0] %vm672, %v766
      %v771 = vmul.f32 %v639, %v698
      %v772 = vmul.f32 %v640, %v700
      %v773 = vlog2.pop %v771
      %v774 = vmul.f32 %v773, 0.6931472
      %v775 = vlog2.pop %v772
      %v776 = vmul.f32 %v775, 0.6931472
      %v779 = vcombine.low %v774, %v776
      %v781 = vunpack.c.l.s4 1966171168
      %v782 = vunpack.c.0.s8 %v781
      %v783 = vlaneseq
      %v784 = vshrl.u32 %v783, 7
      %v785 = vsub.s32 %v782, %v784
      %v786 = vrot.slane %v779, %v785
      %v788 = vunpack.c.l.s4 1966171168
      %v789 = vunpack.c.0.s8 %v788
      %v790 = vlaneseq
      %v791 = vshrl.u32 %v790, 7
      %v792 = vsub.s32 %v789, %v791
      %v793 = vrot.slane %v786, %v792
      %v794 = vcombine.high %v793, %v793
      %s796 = scalar_lea.vmem %s286, 3
      %797 = vst.msk [vmem:[%s796] ss:$8 sm:$0x3] %vm672, %v794
      %798 = vst.msk [vmem:[%s796] ss:$8 sm:$0x0] %vm672, %v794
      %v799 = vmul.f32 %v639, %v745
      %v800 = vmul.f32 %v640, %v747
      %v801 = vlog2.pop %v799
      %v802 = vmul.f32 %v801, 0.6931472
      %v803 = vlog2.pop %v800
      %v804 = vmul.f32 %v803, 0.6931472
      %v807 = vcombine.low %v802, %v804
      %v809 = vunpack.c.l.s4 1966171168
      %v810 = vunpack.c.0.s8 %v809
      %v811 = vlaneseq
      %v812 = vshrl.u32 %v811, 7
      %v813 = vsub.s32 %v810, %v812
      %v814 = vrot.slane %v807, %v813
      %v815 = vcombine.high %v814, %v814
      %v817 = vunpack.c.l.s4 1966171168
      %v818 = vunpack.c.0.s8 %v817
      %v819 = vlaneseq
      %v820 = vshrl.u32 %v819, 7
      %v821 = vsub.s32 %v818, %v820
      %v822 = vrot.slane %v815, %v821
      %v823 = vcombine.high %v822, %v822
      %s825 = scalar_lea.vmem %s286, 4
      %826 = vst.msk [vmem:[%s825] ss:$8 sm:$0x3] %vm672, %v823
      %827 = vst.msk [vmem:[%s825] ss:$8 sm:$0x0] %vm672, %v823
      %s828 = smul.u32 2, %s20
      %p829 = scmp.lt.s32.totalorder %s19, 1
      %s830 = scalar_select %p829, %s19, 1
      %p831 = scmp.lt.s32.totalorder %s828, 1
      %s832 = scalar_select %p831, %s828, 1
      %s833 = smul.addr %s830, 2
      %s834 = sadd.s32 %s832, %s833
      %s835 = smul.addr %s834, 8
      %s836 = scalar_lea.vmem %s4, %s835
      // Predicated region
      $region37: #{rpn_loss_forward.4} parent=35 // pred_check
        %p837 = pneg %p153
      $region38: #{rpn_loss_forward.4} parent=35 // pred_check_branch
        %839 = sbr.rel (%p837) target = $region40
      $region39: #{rpn_loss_forward.4} parent=35 // pred_region
        %s840 = smul.u32 2, %s20
      $region40: #{rpn_loss_forward.4} parent=35 // pred_fallthru
        _
    $region36: #{rpn_loss_forward.4} parent=5 // pred_fallthru
      _
    %p841 = scmp.le.s32.totalorder 2, %s10
    // Predicated region
    $region41: #{rpn_loss_forward.4} parent=5 // pred_check
      %p842 = pneg %p841
    $region42: #{rpn_loss_forward.4} parent=5 // pred_check_branch
      %844 = sbr.rel (%p842) target = $region44
    $region43: #{rpn_loss_forward.4} parent=5 // pred_region
      %s845 = ssub.s32 %s10, 2
      // Predicated region
      $region45: #{rpn_loss_forward.4} parent=43 // pred_check
        %p846 = pneg %p159
      $region46: #{rpn_loss_forward.4} parent=43 // pred_check_branch
        %848 = sbr.rel (%p846) target = $region48
      $region47: #{rpn_loss_forward.4} parent=43 // pred_region
        %s849 = smul.u32 2, %s22
        %p850 = scmp.lt.s32.totalorder %s21, 1
        %s851 = scalar_select %p850, %s21, 1
        %p852 = scmp.lt.s32.totalorder %s849, 1
        %s853 = scalar_select %p852, %s849, 1
        %s854 = smul.addr %s851, 2
        %s855 = sadd.s32 %s853, %s854
        %s856 = smul.addr %s855, 8
        %s857 = scalar_lea.vmem %s4, %s856
      $region48: #{rpn_loss_forward.4} parent=43 // pred_fallthru
        _
    $region44: #{rpn_loss_forward.4} parent=5 // pred_fallthru
      _
  $region6: #{rpn_loss_forward.4} parent=0 // loop_footer
    %s14 = sadd.s32 1, %s10
  $region7: #{rpn_loss_forward.4} parent=0 // loop_footer_branch
    %9 = sbr.rel target = $region3
  $region8: #{rpn_loss_forward.4} parent=0 // loop_exit
    _

// kernel: rpn_loss_forward.5
$region0: #{rpn_loss_forward.5}
  #allocation0 [shape = 'u32[]', space=smem, size = 0x4, offset = 0x4, fixed_abs, tag = 'smem constant byte address 0x4 - core index']
  #allocation1 [shape = 'u32[144,128]{1,0:T(1,128)}', space=vmem, size = 0x12000, scoped, tag = 'internal scratch']
  %s0 = inlined_call_operand.vmem [shape: f32[2,3,256], index: 0, kind: input, shape index: {}]
  %s1 = inlined_call_operand.vmem [shape: f32[2,4,256], index: 1, kind: input, shape index: {}]
  %s2 = inlined_call_operand.vmem [shape: f32[2,5,256], index: 2, kind: input, shape index: {}]
  %s3 = inlined_call_operand.vmem [shape: f32[2,1,128], index: 3, kind: output, shape index: {}]
  %s4 = sld [smem:[#allocation0]]
  $region45: #{rpn_loss_forward.5} parent=0
    _
  %s6 = ssub.s32 1, %s4
  %s7 = scalar_select 0, %s6, %s4
  loop: start=0, step=1, limit=4
  $region2: #{rpn_loss_forward.5} parent=0 // loop_pre_header
    _
  $region3: #{rpn_loss_forward.5} parent=0 // loop_header
    %s9 = sphi 0, %s13
    %p10 = scmp.ge.s32.totalorder %s9, 4
    %s16 = sphi 0, %s28
    %s17 = sphi 0, %s24
    %s18 = sphi 0, %s16
    %s19 = sphi 0, %s17
    %s20 = sphi 0, %s18
    %s21 = sphi 0, %s19
    %s33 = sphi 0, %s35
    %s36 = sphi 0, %s33
    %s37 = sphi 0, %s36
    %s53 = sphi 0, %s37
    %s61 = sphi 0, %s63
    %s64 = sphi 0, %s61
    %s65 = sphi 0, %s64
    %s81 = sphi 0, %s65
    %s89 = sphi 0, %s91
    %s92 = sphi 0, %s89
    %s93 = sphi 0, %s92
    %s109 = sphi 0, %s93
    %s117 = sphi 0, %s119
    %s120 = sphi 0, %s117
    %s121 = sphi 0, %s120
    %s137 = sphi 0, %s121
  $region4: #{rpn_loss_forward.5} parent=0 // loop_header_branch
    %12 = sbr.rel (%p10) target = $region8
  $region5: #{rpn_loss_forward.5} parent=0 // loop_body
    %s14 = ssub.s32 %s9, 1
    %s15 = ssub.s32 %s9, 2
    %s22 = sadd.s32 1, %s17
    %p23 = scmp.ge.s32.totalorder %s22, 1
    %s24 = scalar_select %p23, 0, %s22
    %s25 = sadd.s32 1, %s16
    %s26 = scalar_select %p23, %s25, %s16
    %p27 = scmp.ge.s32.totalorder %s26, 2
    %s28 = scalar_select %p27, 0, %s26
    %s29 = ssub.s32 %s16, %s28
    %s30 = ssub.s32 %s17, %s24
    %s31 = sor.u32 %s29, %s30
    %p32 = scmp.eq.s32.totalorder %s31, 0
    %s34 = sadd.s32 %s33, 1
    %s35 = scalar_select %p32, %s33, %s34
    %p38 = pneg %p32
    %p39 = scmp.eq.s32.totalorder %s9, 1
    %p40 = por %p38, %p39
    %p41 = scmp.ne.s32.totalorder %s33, %s36
    %p42 = scmp.eq.s32.totalorder %s9, 0
    %p43 = por %p41, %p42
    %p44 = scmp.ne.s32.totalorder %s33, %s36
    %p45 = scmp.eq.s32.totalorder %s14, 1
    %p46 = por %p44, %p45
    %p47 = scmp.ne.s32.totalorder %s36, %s37
    %p48 = scmp.eq.s32.totalorder %s14, 0
    %p49 = por %p47, %p48
    %p50 = scmp.ne.s32.totalorder %s36, %s37
    %p51 = scmp.eq.s32.totalorder %s15, 1
    %p52 = por %p50, %p51
    %p54 = scmp.ne.s32.totalorder %s37, %s53
    %p55 = scmp.eq.s32.totalorder %s15, 0
    %p56 = por %p54, %p55
    %s57 = ssub.s32 %s16, %s28
    %s58 = ssub.s32 %s17, %s24
    %s59 = sor.u32 %s57, %s58
    %p60 = scmp.eq.s32.totalorder %s59, 0
    %s62 = sadd.s32 %s61, 1
    %s63 = scalar_select %p60, %s61, %s62
    %p66 = pneg %p60
    %p67 = scmp.eq.s32.totalorder %s9, 1
    %p68 = por %p66, %p67
    %p69 = scmp.ne.s32.totalorder %s61, %s64
    %p70 = scmp.eq.s32.totalorder %s9, 0
    %p71 = por %p69, %p70
    %p72 = scmp.ne.s32.totalorder %s61, %s64
    %p73 = scmp.eq.s32.totalorder %s14, 1
    %p74 = por %p72, %p73
    %p75 = scmp.ne.s32.totalorder %s64, %s65
    %p76 = scmp.eq.s32.totalorder %s14, 0
    %p77 = por %p75, %p76
    %p78 = scmp.ne.s32.totalorder %s64, %s65
    %p79 = scmp.eq.s32.totalorder %s15, 1
    %p80 = por %p78, %p79
    %p82 = scmp.ne.s32.totalorder %s65, %s81
    %p83 = scmp.eq.s32.totalorder %s15, 0
    %p84 = por %p82, %p83
    %s85 = ssub.s32 %s16, %s28
    %s86 = ssub.s32 %s17, %s24
    %s87 = sor.u32 %s85, %s86
    %p88 = scmp.eq.s32.totalorder %s87, 0
    %s90 = sadd.s32 %s89, 1
    %s91 = scalar_select %p88, %s89, %s90
    %p94 = pneg %p88
    %p95 = scmp.eq.s32.totalorder %s9, 1
    %p96 = por %p94, %p95
    %p97 = scmp.ne.s32.totalorder %s89, %s92
    %p98 = scmp.eq.s32.totalorder %s9, 0
    %p99 = por %p97, %p98
    %p100 = scmp.ne.s32.totalorder %s89, %s92
    %p101 = scmp.eq.s32.totalorder %s14, 1
    %p102 = por %p100, %p101
    %p103 = scmp.ne.s32.totalorder %s92, %s93
    %p104 = scmp.eq.s32.totalorder %s14, 0
    %p105 = por %p103, %p104
    %p106 = scmp.ne.s32.totalorder %s92, %s93
    %p107 = scmp.eq.s32.totalorder %s15, 1
    %p108 = por %p106, %p107
    %p110 = scmp.ne.s32.totalorder %s93, %s109
    %p111 = scmp.eq.s32.totalorder %s15, 0
    %p112 = por %p110, %p111
    %s113 = sadd.s32 %s16, %s17
    %s114 = sadd.s32 %s28, %s24
    %s115 = ssub.s32 %s113, %s114
    %p116 = scmp.eq.s32.totalorder %s115, 0
    %s118 = sadd.s32 %s117, 1
    %s119 = scalar_select %p116, %s117, %s118
    %p122 = pneg %p116
    %p123 = scmp.eq.s32.totalorder %s9, 1
    %p124 = por %p122, %p123
    %p125 = scmp.ne.s32.totalorder %s117, %s120
    %p126 = scmp.eq.s32.totalorder %s9, 0
    %p127 = por %p125, %p126
    %p128 = scmp.ne.s32.totalorder %s117, %s120
    %p129 = scmp.eq.s32.totalorder %s14, 1
    %p130 = por %p128, %p129
    %p131 = scmp.ne.s32.totalorder %s120, %s121
    %p132 = scmp.eq.s32.totalorder %s14, 0
    %p133 = por %p131, %p132
    %p134 = scmp.ne.s32.totalorder %s120, %s121
    %p135 = scmp.eq.s32.totalorder %s15, 1
    %p136 = por %p134, %p135
    %p138 = scmp.ne.s32.totalorder %s121, %s137
    %p139 = scmp.eq.s32.totalorder %s15, 0
    %p140 = por %p138, %p139
    %p141 = scmp.le.s32.totalorder 1, %s9
    %p142 = scmp.lt.s32.totalorder %s9, 3
    %p143 = pnand %p141, %p142
    %p144 = pneg %p143
    // Predicated region
    $region9: #{rpn_loss_forward.5} parent=5 // pred_check
      _
    $region10: #{rpn_loss_forward.5} parent=5 // pred_check_branch
      %146 = sbr.rel (%p143) target = $region12
    $region11: #{rpn_loss_forward.5} parent=5 // pred_region
      %s147 = ssub.s32 %s9, 1
    $region12: #{rpn_loss_forward.5} parent=5 // pred_fallthru
      _
    %p148 = scmp.lt.s32.totalorder %s9, 2
    // Predicated region
    $region13: #{rpn_loss_forward.5} parent=5 // pred_check
      %p149 = pneg %p148
    $region14: #{rpn_loss_forward.5} parent=5 // pred_check_branch
      %151 = sbr.rel (%p149) target = $region16
    $region15: #{rpn_loss_forward.5} parent=5 // pred_region
      // Predicated region
      $region17: #{rpn_loss_forward.5} parent=15 // pred_check
        %p152 = pneg %p43
      $region18: #{rpn_loss_forward.5} parent=15 // pred_check_branch
        %154 = sbr.rel (%p152) target = $region20
      $region19: #{rpn_loss_forward.5} parent=15 // pred_region
        %s155 = smul.u32 2, %s17
        %p156 = scmp.lt.s32.totalorder %s16, 1
        %s157 = scalar_select %p156, %s16, 1
        %p158 = scmp.lt.s32.totalorder %s155, 1
        %s159 = scalar_select %p158, %s155, 1
        %s160 = smul.addr %s157, 2
        %s161 = sadd.s32 %s159, %s160
        %s162 = smul.addr %s161, 4
        %s163 = scalar_lea.vmem %s0, %s162
        %s164 = smul.u32 2, %s17
      $region20: #{rpn_loss_forward.5} parent=15 // pred_fallthru
        _
      // Predicated region
      $region21: #{rpn_loss_forward.5} parent=15 // pred_check
        %p165 = pneg %p71
      $region22: #{rpn_loss_forward.5} parent=15 // pred_check_branch
        %167 = sbr.rel (%p165) target = $region24
      $region23: #{rpn_loss_forward.5} parent=15 // pred_region
        %s168 = smul.u32 2, %s17
        %p169 = scmp.lt.s32.totalorder %s16, 1
        %s170 = scalar_select %p169, %s16, 1
        %p171 = scmp.lt.s32.totalorder %s168, 1
        %s172 = scalar_select %p171, %s168, 1
        %s173 = smul.addr %s170, 2
        %s174 = sadd.s32 %s172, %s173
        %s175 = smul.addr %s174, 4
        %s176 = scalar_lea.vmem %s1, %s175
        %s177 = smul.u32 2, %s17
      $region24: #{rpn_loss_forward.5} parent=15 // pred_fallthru
        _
      // Predicated region
      $region25: #{rpn_loss_forward.5} parent=15 // pred_check
        %p178 = pneg %p99
      $region26: #{rpn_loss_forward.5} parent=15 // pred_check_branch
        %180 = sbr.rel (%p178) target = $region28
      $region27: #{rpn_loss_forward.5} parent=15 // pred_region
        %s181 = smul.u32 2, %s17
        %p182 = scmp.lt.s32.totalorder %s16, 1
        %s183 = scalar_select %p182, %s16, 1
        %p184 = scmp.lt.s32.totalorder %s181, 1
        %s185 = scalar_select %p184, %s181, 1
        %s186 = smul.addr %s183, 2
        %s187 = sadd.s32 %s185, %s186
        %s188 = smul.addr %s187, 8
        %s189 = scalar_lea.vmem %s2, %s188
        %s190 = smul.u32 2, %s17
      $region28: #{rpn_loss_forward.5} parent=15 // pred_fallthru
        _
    $region16: #{rpn_loss_forward.5} parent=5 // pred_fallthru
      _
    %p191 = scmp.le.s32.totalorder 1, %s9
    %p192 = scmp.lt.s32.totalorder %s9, 3
    %p193 = pnand %p191, %p192
    %p194 = pneg %p193
    // Predicated region
    $region29: #{rpn_loss_forward.5} parent=5 // pred_check
      _
    $region30: #{rpn_loss_forward.5} parent=5 // pred_check_branch
      %196 = sbr.rel (%p193) target = $region32
    $region31: #{rpn_loss_forward.5} parent=5 // pred_region
      %s197 = ssub.s32 %s9, 1
      %s198 = smul.u32 2, %s19
      %p199 = scmp.lt.s32.totalorder %s18, 1
      %s200 = scalar_select %p199, %s18, 1
      %p201 = scmp.lt.s32.totalorder %s198, 1
      %s202 = scalar_select %p201, %s198, 1
      %s203 = smul.addr %s200, 2
      %s204 = sadd.s32 %s202, %s203
      %s205 = smul.addr %s204, 4
      %s206 = scalar_lea.vmem %s0, %s205
      %p207 = pneg %p49
      %p208 = pneg %p46
      %s209 = smul.u32 2, %s19
      %p210 = scmp.lt.s32.totalorder %s18, 1
      %s211 = scalar_select %p210, %s18, 1
      %p212 = scmp.lt.s32.totalorder %s209, 1
      %s213 = scalar_select %p212, %s209, 1
      %s214 = smul.addr %s211, 2
      %s215 = sadd.s32 %s213, %s214
      %s216 = smul.addr %s215, 4
      %s217 = scalar_lea.vmem %s1, %s216
      %p218 = pneg %p77
      %p219 = pneg %p74
      %s220 = smul.u32 2, %s19
      %p221 = scmp.lt.s32.totalorder %s18, 1
      %s222 = scalar_select %p221, %s18, 1
      %p223 = scmp.lt.s32.totalorder %s220, 1
      %s224 = scalar_select %p223, %s220, 1
      %s225 = smul.addr %s222, 2
      %s226 = sadd.s32 %s224, %s225
      %s227 = smul.addr %s226, 8
      %s228 = scalar_lea.vmem %s2, %s227
      %p229 = pneg %p105
      %p230 = pneg %p102
      %p231 = pneg %p133
      %p232 = pneg %p130
      %s233 = sadd.s32 %s18, %s19
      %p234 = scmp.lt.s32.totalorder %s233, 1
      %s235 = scalar_select %p234, %s233, 1
      %s236 = scalar_lea.vmem %s3, %s235
      %s237 = smul.u32 2, %s19
      %p238 = scmp.lt.s32.totalorder %s18, 1
      %s239 = scalar_select %p238, %s18, 1
      %p240 = scmp.lt.s32.totalorder %s237, 1
      %s241 = scalar_select %p240, %s237, 1
      %s242 = smul.addr %s239, 2
      %s243 = sadd.s32 %s241, %s242
      %s244 = smul.addr %s243, 4
      %s245 = scalar_lea.vmem %s0, %s244
      %s246 = smul.u32 2, %s19
      %s247 = smul.u32 2, %s19
      %p248 = scmp.lt.s32.totalorder %s18, 1
      %s249 = scalar_select %p248, %s18, 1
      %p250 = scmp.lt.s32.totalorder %s247, 1
      %s251 = scalar_select %p250, %s247, 1
      %s252 = smul.addr %s249, 2
      %s253 = sadd.s32 %s251, %s252
      %s254 = smul.addr %s253, 4
      %s255 = scalar_lea.vmem %s1, %s254
      %s256 = smul.u32 2, %s19
      %s257 = smul.u32 2, %s19
      %p258 = scmp.lt.s32.totalorder %s18, 1
      %s259 = scalar_select %p258, %s18, 1
      %p260 = scmp.lt.s32.totalorder %s257, 1
      %s261 = scalar_select %p260, %s257, 1
      %s262 = smul.addr %s259, 2
      %s263 = sadd.s32 %s261, %s262
      %s264 = smul.addr %s263, 8
      %s265 = scalar_lea.vmem %s2, %s264
      %s266 = smul.u32 2, %s19
      %s267 = sadd.s32 %s18, %s19
      %p268 = scmp.lt.s32.totalorder %s267, 1
      %s269 = scalar_select %p268, %s267, 1
      %s270 = scalar_lea.vmem %s3, %s269
      %s271 = sadd.s32 %s18, %s19
      %v272 = vld [vmem:[%s245] sm:$0x77]
      %v273 = vld [vmem:[%s255] sm:$0xff]
      %v274 = vld [vmem:[%s265] sm:$0x1f]
      %v275 = vld [vmem:[%s265 + $0x8] sm:$0x1f]
      %v278 = vcombine.low %v274, %v275
      %v279 = vrot.slane %v278, 5
      %v280 = vrot.slane %v279, 4
      %v282 = vsub.f32 %v273, %v280
      %v283 = vand.u32 2147483647, %v282
      %vm284 = vcmp.lt.f32.partialorder %v283, 0.11111111
      %v285 = vmul.f32 %v282, 0.5
      %v286 = vmul.f32 %v285, %v282
      %v287 = vrcp.pop 0.11111111
      %v288 = vmul.f32 %v286, %v287
      %v289 = vsub.f32 %v283, 0.055555556
      %v290 = vsel %vm284, %v288, %v289
      %vm291 = vcmp.gt.f32.partialorder %v272, 0.0
      %v293 = vrot.slane %v290, 7
      %v295 = vsel %vm291, %v293, 0.0
      %v296 = vadd.f32 %v295, 0.0
      %v297 = vsel %vm291, %v290, 0.0
      %v298 = vadd.f32 %v296, %v297
      %v299 = vrot.slane %v290, 5
      %v300 = vrot.slane %v299, 4
      %v302 = vsel %vm291, %v300, 0.0
      %v303 = vadd.f32 %v298, %v302
      %v304 = vcombine.high %v274, %v275
      %v305 = vrot.slane %v304, 5
      %v307 = vsub.f32 %v273, %v305
      %v308 = vand.u32 2147483647, %v307
      %vm309 = vcmp.lt.f32.partialorder %v308, 0.11111111
      %v310 = vmul.f32 %v307, 0.5
      %v311 = vmul.f32 %v310, %v307
      %v312 = vmul.f32 %v311, %v287
      %v313 = vsub.f32 %v308, 0.055555556
      %v314 = vsel %vm309, %v312, %v313
      %v316 = vrot.slane %v314, 6
      %v317 = vrot.slane %v316, 4
      %v319 = vsel %vm291, %v317, 0.0
      %v320 = vadd.f32 %v303, %v319
      %v322 = vlaneseq
      %v323 = vshrl.u32 %v322, 7
      %v324 = vsub.s32 1, %v323
      %v325 = vrot.slane %v320, %v324
      %v326 = vlaneseq
      %v327 = vshrl.u32 %v326, 7
      %v328 = vsub.s32 5, %v327
      %v329 = vrot.slane %v320, %v328
      %vm332 = vcmask 1041409
      %v333 = vsel %vm332, %v325, 0.0
      %v334 = vsel %vm332, %v329, 0.0
      %v335 = vadd.f32 %v333, %v334
      %336 = vadd.xlane.f32.xlu0 %v335
      %v337 = vpop.xlane.xlu0 %336
      %v338 = vmax.f32 %v272, 0.0
      %v340 = vmul.f32 %v272, %v278
      %v341 = vsub.f32 %v338, %v340
      %v342 = vand.u32 2147483647, %v272
      %v343 = vsub.f32 0.0, %v342
      %v344 = vmul.f32 %v343, 1.442695
      %v345 = vpow.pop %v344
      %v346 = vadd.f32 %v345, 1.0
      %v347 = vlog2.pop %v346
      %v348 = vmul.f32 %v347, 0.6931472
      %v349 = vadd.f32 %v341, %v348
      %v351 = vrot.slane %v349, 6
      %v353 = vsel %vm291, %v351, 0.0
      %v355 = vlaneseq
      %v356 = vshrl.u32 %v355, 7
      %v357 = vsub.s32 2, %v356
      %v358 = vrot.slane %v353, %v357
      %v359 = vlaneseq
      %v360 = vshrl.u32 %v359, 7
      %v361 = vsub.s32 6, %v360
      %v362 = vrot.slane %v353, %v361
      %vm365 = vcmask 1042434
      %v366 = vsel %vm365, %v358, 0.0
      %v367 = vsel %vm365, %v362, 0.0
      %v368 = vadd.f32 %v366, %v367
      %369 = vadd.xlane.f32.xlu0 %v368
      %v370 = vpop.xlane.xlu0 %369
      %v372 = vlaneseq
      %v373 = vshrl.u32 %v372, 7
      %v374 = vsub.s32 2, %v373
      %v375 = vrot.slane %v272, %v374
      %v376 = vlaneseq
      %v377 = vshrl.u32 %v376, 7
      %v378 = vsub.s32 6, %v377
      %v379 = vrot.slane %v272, %v378
      %v382 = vsel %vm365, %v375, 0.0
      %v383 = vsel %vm365, %v379, 0.0
      %v384 = vadd.f32 %v382, %v383
      %385 = vadd.xlane.f32.xlu0 %v384
      %v386 = vpop.xlane.xlu0 %385
      %v387 = vlaneseq
      %v388 = vand.u32 %v387, 127
      %vm389 = vcmp.eq.s32.totalorder %v388, 0
      %vm390 = vcmp.eq.s32.totalorder %v388, 1
      %vm391 = vcmp.eq.s32.totalorder %v388, 2
      %v392 = vsel %vm391, %v386, 0.0
      %v393 = vsel %vm390, %v370, %v392
      %v395 = vrot.slane %v393, 1
      %v397 = vsel %vm389, %v337, %v395
      %398 = vst [vmem:[%s270 - $0x1] sm:$0x2] %v397
      %s399 = sadd.s32 %s18, %s19
      %p400 = scmp.lt.s32.totalorder %s399, 1
      %s401 = scalar_select %p400, %s399, 1
      %s402 = scalar_lea.vmem %s3, %s401
      // Predicated region
      $region33: #{rpn_loss_forward.5} parent=31 // pred_check
        %p403 = pneg %p130
      $region34: #{rpn_loss_forward.5} parent=31 // pred_check_branch
        %405 = sbr.rel (%p403) target = $region36
      $region35: #{rpn_loss_forward.5} parent=31 // pred_region
        %s406 = sadd.s32 %s18, %s19
      $region36: #{rpn_loss_forward.5} parent=31 // pred_fallthru
        _
    $region32: #{rpn_loss_forward.5} parent=5 // pred_fallthru
      _
    %p407 = scmp.le.s32.totalorder 2, %s9
    // Predicated region
    $region37: #{rpn_loss_forward.5} parent=5 // pred_check
      %p408 = pneg %p407
    $region38: #{rpn_loss_forward.5} parent=5 // pred_check_branch
      %410 = sbr.rel (%p408) target = $region40
    $region39: #{rpn_loss_forward.5} parent=5 // pred_region
      %s411 = ssub.s32 %s9, 2
      // Predicated region
      $region41: #{rpn_loss_forward.5} parent=39 // pred_check
        %p412 = pneg %p136
      $region42: #{rpn_loss_forward.5} parent=39 // pred_check_branch
        %414 = sbr.rel (%p412) target = $region44
      $region43: #{rpn_loss_forward.5} parent=39 // pred_region
        %s415 = sadd.s32 %s20, %s21
        %p416 = scmp.lt.s32.totalorder %s415, 1
        %s417 = scalar_select %p416, %s415, 1
        %s418 = scalar_lea.vmem %s3, %s417
      $region44: #{rpn_loss_forward.5} parent=39 // pred_fallthru
        _
    $region40: #{rpn_loss_forward.5} parent=5 // pred_fallthru
      _
  $region6: #{rpn_loss_forward.5} parent=0 // loop_footer
    %s13 = sadd.s32 1, %s9
  $region7: #{rpn_loss_forward.5} parent=0 // loop_footer_branch
    %8 = sbr.rel target = $region3
  $region8: #{rpn_loss_forward.5} parent=0 // loop_exit
    _

</llo_original>
